<compile_context>
chip_gen: v6e
topology: v6e:2x2x1
jax: 0.10.0
libtpu: 0.0.40
codegen_flags: <defaults>
</compile_context>

<pallas_src>
import jax
import jax.numpy as jnp
from jax import lax
from jax.experimental import pallas as pl
from jax.experimental.pallas import tpu as pltpu

WINDOW = 3
PAD = WINDOW // 2
C1 = 0.01 ** 2
C2 = 0.03 ** 2
_POOL_SCALE = 1.0 / (WINDOW * WINDOW)

# Conservative count of live block-sized f32 temporaries (pipeline buffers for
# x/y/out + in-kernel casts, products, pooled maps, masks, final arithmetic).
_LIVE_BLOCK_COPIES = 24


def _cdiv(a, b):
    return -(-a // b)


def _round_up(a, b):
    return ((a + b - 1) // b) * b


def _vmem_limit_bytes():
    """Per-generation VMEM cap: ~3/4 of physical, capped at 96 MiB.

    -> 96 MiB on v5e/v6e (128 MiB physical), 48 MiB on v7x (64 MiB physical).
    Falls back to a conservative 48 MiB if the query is unavailable.
    """
    cap = None
    try:
        info_fn = getattr(pltpu, "get_tpu_info", None)
        if info_fn is not None:
            cap = getattr(info_fn(), "vmem_capacity_bytes", None)
    except Exception:
        cap = None
    if not cap:
        cap = 64 * 1024 * 1024
    return int(min(96 * 1024 * 1024, (cap * 3) // 4))


def _choose_block_channels(nc, h, w, vmem_limit_bytes):
    """Channels per grid step (lane dim of the block).

    Physical-footprint accounting: one f32 (H, W, 128) slab occupies
    H * round_up(W, 8) * 128 * 4 bytes in VMEM regardless of the logical W.
    """
    if nc <= 128:
        return nc  # single full-extent lane block (satisfies (8,128) rule)

    per_group = h * _round_up(w, 8) * 128 * 4  # one 128-channel f32 slab
    budget_groups = max(1, vmem_limit_bytes // (_LIVE_BLOCK_COPIES * per_group))
    groups_total = _cdiv(nc, 128)
    g = min(groups_total, budget_groups)
    # Keep >= 2 grid steps when possible so the "parallel" axis can shard
    # across the two v7x TensorCores.
    if groups_total >= 2:
        g = min(g, _cdiv(groups_total, 2))
    # Rebalance so the grid is near-even (avoids a ragged / duplicated tail).
    steps = _cdiv(groups_total, g)
    g = _cdiv(groups_total, steps)
    return int(g * 128)


def _ssim_kernel(x_ref, y_ref, o_ref):
    # Blocks are (H, W, TBc): H on the leading dim, W on sublanes, channels on
    # lanes.  Cast to f32 in-kernel (inputs stay native dtype in HBM).
    H, W, _ = o_ref.shape
    x = x_ref[...].astype(jnp.float32)
    y = y_ref[...].astype(jnp.float32)

    # Column masks for the reflect boundary, hoisted so the iota/broadcast is
    # materialized once (JAX does not CSE broadcast_in_dim across calls).
    col = lax.broadcasted_iota(jnp.int32, x.shape, 1)
    first_col = col == 0
    last_col = col == (W - 1)

    def pool3(a):
        """ReflectionPad2d(1) + 3x3 stride-1 average pool, no padded temps."""
        # W (sublane) direction: neighbors via XLU rolls + 2-column fixup.
        left = pltpu.roll(a, shift=1, axis=1)        # a[:, j-1]  (wraps at j=0)
        right = pltpu.roll(a, shift=W - 1, axis=1)   # a[:, j+1]  (wraps at j=W-1)
        hsum = (a
                + jnp.where(first_col, right, left)   # reflect: col -1 -> col 1
                + jnp.where(last_col, left, right))   # reflect: col W -> col W-2
        # H (leading, untiled) direction: whole-vreg row shifts (no XLU).
        up = jnp.concatenate([hsum[1:2], hsum[:H - 1]], axis=0)    # row -1 -> row 1
        down = jnp.concatenate([hsum[1:], hsum[H - 2:H - 1]], axis=0)  # row H -> H-2
        return (up + hsum + down) * _POOL_SCALE

    mu_x = pool3(x)
    mu_y = pool3(y)
    sigma_x = pool3(x * x) - mu_x * mu_x
    sigma_y = pool3(y * y) - mu_y * mu_y
    sigma_xy = pool3(x * y) - mu_x * mu_y

    ssim_n = (2.0 * mu_x * mu_y + C1) * (2.0 * sigma_xy + C2)
    ssim_d = (mu_x * mu_x + mu_y * mu_y + C1) * (sigma_x + sigma_y + C2)
    inv_d = pl.reciprocal(ssim_d, approx=False)  # exact; ssim_d can be ~C1*C2
    out = jnp.clip((1.0 - ssim_n * inv_d) * 0.5, 0.0, 1.0)
    o_ref[...] = out.astype(o_ref.dtype)


def ssim_pallas(x, y, *, block_channels=None):
    """x, y: (N, C, H, W). Returns (N, C, H, W) SSIM loss map (simplified)."""
    N, C, H, W = x.shape
    if H < 2 or W < 2:
        raise ValueError("SSIM with ReflectionPad2d(1) requires H >= 2 and W >= 2")
    NC = N * C

    # Channels-last slabs so the batched channel dim sits on the lane axis.
    # (Pure layout plumbing; no dtype cast — the kernel casts in-VMEM.)
    xcl = jnp.transpose(x.reshape(NC, H, W), (1, 2, 0))  # (H, W, NC)
    ycl = jnp.transpose(y.reshape(NC, H, W), (1, 2, 0))

    vmem_limit = _vmem_limit_bytes()
    tbc = block_channels or _choose_block_channels(NC, H, W, vmem_limit)
    grid = (pl.cdiv(NC, tbc),)

    out = pl.pallas_call(
        _ssim_kernel,
        out_shape=jax.ShapeDtypeStruct((H, W, NC), x.dtype),
        grid_spec=pltpu.PrefetchScalarGridSpec(
            num_scalar_prefetch=0,
            grid=grid,
            in_specs=[
                pl.BlockSpec((H, W, tbc), lambda i: (0, 0, i)),
                pl.BlockSpec((H, W, tbc), lambda i: (0, 0, i)),
            ],
            out_specs=pl.BlockSpec((H, W, tbc), lambda i: (0, 0, i)),
        ),
        compiler_params=pltpu.CompilerParams(
            dimension_semantics=("parallel",),
            vmem_limit_bytes=vmem_limit,
        ),
    )(xcl, ycl)

    return jnp.transpose(out, (2, 0, 1)).reshape(N, C, H, W)


def _ssim_ref(x, y):
    """Pure-JAX reference matching PyTorch compute_simplified (9-tap pool)."""
    x = x.astype(jnp.float32)
    y = y.astype(jnp.float32)
    xp = jnp.pad(x, ((0, 0), (0, 0), (PAD, PAD), (PAD, PAD)), mode="reflect")
    yp = jnp.pad(y, ((0, 0), (0, 0), (PAD, PAD), (PAD, PAD)), mode="reflect")
    H, W = x.shape[2], x.shape[3]

    def pool3(a):
        acc = jnp.zeros_like(a[:, :, :H, :W])
        for di in range(WINDOW):
            for dj in range(WINDOW):
                acc = acc + a[:, :, di:di + H, dj:dj + W]
        return acc / (WINDOW * WINDOW)

    mu_x = pool3(xp)
    mu_y = pool3(yp)
    sigma_x = pool3(xp * xp) - mu_x ** 2
    sigma_y = pool3(yp * yp) - mu_y ** 2
    sigma_xy = pool3(xp * yp) - mu_x * mu_y
    n = (2 * mu_x * mu_y + C1) * (2 * sigma_xy + C2)
    d = (mu_x ** 2 + mu_y ** 2 + C1) * (sigma_x + sigma_y + C2)
    return jnp.clip((1 - n / d) / 2, 0.0, 1.0)


if __name__ == "__main__":
    key = jax.random.PRNGKey(0)
    k1, k2 = jax.random.split(key)
    N, C, H, W = 2, 4, 16, 16
    x = jax.random.uniform(k1, (N, C, H, W), dtype=jnp.float32)
    y = jax.random.uniform(k2, (N, C, H, W), dtype=jnp.float32)

    out = ssim_pallas(x, y)
    out = jax.block_until_ready(out)

    ref = _ssim_ref(x, y)
    assert out.shape == (N, C, H, W)
    assert jnp.allclose(out.astype(jnp.float32), ref, atol=1e-5, rtol=1e-5)

    print("KERNEL_OK")
</pallas_src>

<mosaic_0001>
module attributes {stable_mosaic.version = 11 : i64} {
  func.func @_ssim_kernel(%arg0: i32, %arg1: memref<16x16x8xf32, #tpu.memory_space<vmem>>, %arg2: memref<16x16x8xf32, #tpu.memory_space<vmem>>, %arg3: memref<16x16x8xf32, #tpu.memory_space<vmem>>) attributes {dimension_semantics = [#tpu.dimension_semantics<parallel>], iteration_bounds = array<i64: 1>, scalar_prefetch = 0 : i64, scratch_operands = 0 : i64, tpu.core_type = #tpu.core_type<tc>, window_params = [{transform_indices = @transform_0, window_bounds = array<i64: 16, 16, 8>}, {transform_indices = @transform_1, window_bounds = array<i64: 16, 16, 8>}, {transform_indices = @transform_2, window_bounds = array<i64: 16, 16, 8>}]} {
    %c0 = arith.constant 0 : index
    %c0_0 = arith.constant 0 : index
    %c0_1 = arith.constant 0 : index
    %0 = vector.load %arg1[%c0, %c0_0, %c0_1] : memref<16x16x8xf32, #tpu.memory_space<vmem>>, vector<16x16x8xf32>
    %c0_2 = arith.constant 0 : index
    %c0_3 = arith.constant 0 : index
    %c0_4 = arith.constant 0 : index
    %1 = vector.load %arg2[%c0_2, %c0_3, %c0_4] : memref<16x16x8xf32, #tpu.memory_space<vmem>>, vector<16x16x8xf32>
    %2 = tpu.iota {dimensions = array<i32: 1>} : vector<16x16x8xi32>
    %c0_i32 = arith.constant 0 : i32
    %3 = vector.broadcast %c0_i32 : i32 to vector<16x16x8xi32>
    %4 = arith.cmpi eq, %2, %3 : vector<16x16x8xi32>
    %c15_i32 = arith.constant 15 : i32
    %5 = vector.broadcast %c15_i32 : i32 to vector<16x16x8xi32>
    %6 = arith.cmpi eq, %2, %5 : vector<16x16x8xi32>
    %c1_i32 = arith.constant 1 : i32
    %7 = tpu.dynamic_rotate %0 by %c1_i32 dim 1 : vector<16x16x8xf32>, i32 -> vector<16x16x8xf32>
    %c15_i32_5 = arith.constant 15 : i32
    %8 = tpu.dynamic_rotate %0 by %c15_i32_5 dim 1 : vector<16x16x8xf32>, i32 -> vector<16x16x8xf32>
    %9 = arith.select %4, %8, %7 : vector<16x16x8xi1>, vector<16x16x8xf32>
    %10 = arith.addf %0, %9 : vector<16x16x8xf32>
    %11 = arith.select %6, %7, %8 : vector<16x16x8xi1>, vector<16x16x8xf32>
    %12 = arith.addf %10, %11 : vector<16x16x8xf32>
    %13 = vector.extract_strided_slice %12 {offsets = [1, 0, 0], sizes = [1, 16, 8], strides = [1, 1, 1]} : vector<16x16x8xf32> to vector<1x16x8xf32>
    %14 = vector.extract_strided_slice %12 {offsets = [0, 0, 0], sizes = [15, 16, 8], strides = [1, 1, 1]} : vector<16x16x8xf32> to vector<15x16x8xf32>
    %15 = tpu.concatenate %13, %14 in 0 : vector<1x16x8xf32>, vector<15x16x8xf32> -> vector<16x16x8xf32>
    %16 = vector.extract_strided_slice %12 {offsets = [1, 0, 0], sizes = [15, 16, 8], strides = [1, 1, 1]} : vector<16x16x8xf32> to vector<15x16x8xf32>
    %17 = vector.extract_strided_slice %12 {offsets = [14, 0, 0], sizes = [1, 16, 8], strides = [1, 1, 1]} : vector<16x16x8xf32> to vector<1x16x8xf32>
    %18 = tpu.concatenate %16, %17 in 0 : vector<15x16x8xf32>, vector<1x16x8xf32> -> vector<16x16x8xf32>
    %19 = arith.addf %15, %12 : vector<16x16x8xf32>
    %20 = arith.addf %19, %18 : vector<16x16x8xf32>
    %cst = arith.constant 0.111111112 : f32
    %21 = vector.broadcast %cst : f32 to vector<16x16x8xf32>
    %22 = arith.mulf %20, %21 : vector<16x16x8xf32>
    %c1_i32_6 = arith.constant 1 : i32
    %23 = tpu.dynamic_rotate %1 by %c1_i32_6 dim 1 : vector<16x16x8xf32>, i32 -> vector<16x16x8xf32>
    %c15_i32_7 = arith.constant 15 : i32
    %24 = tpu.dynamic_rotate %1 by %c15_i32_7 dim 1 : vector<16x16x8xf32>, i32 -> vector<16x16x8xf32>
    %25 = arith.select %4, %24, %23 : vector<16x16x8xi1>, vector<16x16x8xf32>
    %26 = arith.addf %1, %25 : vector<16x16x8xf32>
    %27 = arith.select %6, %23, %24 : vector<16x16x8xi1>, vector<16x16x8xf32>
    %28 = arith.addf %26, %27 : vector<16x16x8xf32>
    %29 = vector.extract_strided_slice %28 {offsets = [1, 0, 0], sizes = [1, 16, 8], strides = [1, 1, 1]} : vector<16x16x8xf32> to vector<1x16x8xf32>
    %30 = vector.extract_strided_slice %28 {offsets = [0, 0, 0], sizes = [15, 16, 8], strides = [1, 1, 1]} : vector<16x16x8xf32> to vector<15x16x8xf32>
    %31 = tpu.concatenate %29, %30 in 0 : vector<1x16x8xf32>, vector<15x16x8xf32> -> vector<16x16x8xf32>
    %32 = vector.extract_strided_slice %28 {offsets = [1, 0, 0], sizes = [15, 16, 8], strides = [1, 1, 1]} : vector<16x16x8xf32> to vector<15x16x8xf32>
    %33 = vector.extract_strided_slice %28 {offsets = [14, 0, 0], sizes = [1, 16, 8], strides = [1, 1, 1]} : vector<16x16x8xf32> to vector<1x16x8xf32>
    %34 = tpu.concatenate %32, %33 in 0 : vector<15x16x8xf32>, vector<1x16x8xf32> -> vector<16x16x8xf32>
    %35 = arith.addf %31, %28 : vector<16x16x8xf32>
    %36 = arith.addf %35, %34 : vector<16x16x8xf32>
    %cst_8 = arith.constant 0.111111112 : f32
    %37 = vector.broadcast %cst_8 : f32 to vector<16x16x8xf32>
    %38 = arith.mulf %36, %37 : vector<16x16x8xf32>
    %39 = arith.mulf %0, %0 : vector<16x16x8xf32>
    %c1_i32_9 = arith.constant 1 : i32
    %40 = tpu.dynamic_rotate %39 by %c1_i32_9 dim 1 : vector<16x16x8xf32>, i32 -> vector<16x16x8xf32>
    %c15_i32_10 = arith.constant 15 : i32
    %41 = tpu.dynamic_rotate %39 by %c15_i32_10 dim 1 : vector<16x16x8xf32>, i32 -> vector<16x16x8xf32>
    %42 = arith.select %4, %41, %40 : vector<16x16x8xi1>, vector<16x16x8xf32>
    %43 = arith.addf %39, %42 : vector<16x16x8xf32>
    %44 = arith.select %6, %40, %41 : vector<16x16x8xi1>, vector<16x16x8xf32>
    %45 = arith.addf %43, %44 : vector<16x16x8xf32>
    %46 = vector.extract_strided_slice %45 {offsets = [1, 0, 0], sizes = [1, 16, 8], strides = [1, 1, 1]} : vector<16x16x8xf32> to vector<1x16x8xf32>
    %47 = vector.extract_strided_slice %45 {offsets = [0, 0, 0], sizes = [15, 16, 8], strides = [1, 1, 1]} : vector<16x16x8xf32> to vector<15x16x8xf32>
    %48 = tpu.concatenate %46, %47 in 0 : vector<1x16x8xf32>, vector<15x16x8xf32> -> vector<16x16x8xf32>
    %49 = vector.extract_strided_slice %45 {offsets = [1, 0, 0], sizes = [15, 16, 8], strides = [1, 1, 1]} : vector<16x16x8xf32> to vector<15x16x8xf32>
    %50 = vector.extract_strided_slice %45 {offsets = [14, 0, 0], sizes = [1, 16, 8], strides = [1, 1, 1]} : vector<16x16x8xf32> to vector<1x16x8xf32>
    %51 = tpu.concatenate %49, %50 in 0 : vector<15x16x8xf32>, vector<1x16x8xf32> -> vector<16x16x8xf32>
    %52 = arith.addf %48, %45 : vector<16x16x8xf32>
    %53 = arith.addf %52, %51 : vector<16x16x8xf32>
    %cst_11 = arith.constant 0.111111112 : f32
    %54 = vector.broadcast %cst_11 : f32 to vector<16x16x8xf32>
    %55 = arith.mulf %53, %54 : vector<16x16x8xf32>
    %56 = arith.mulf %22, %22 : vector<16x16x8xf32>
    %57 = arith.subf %55, %56 : vector<16x16x8xf32>
    %58 = arith.mulf %1, %1 : vector<16x16x8xf32>
    %c1_i32_12 = arith.constant 1 : i32
    %59 = tpu.dynamic_rotate %58 by %c1_i32_12 dim 1 : vector<16x16x8xf32>, i32 -> vector<16x16x8xf32>
    %c15_i32_13 = arith.constant 15 : i32
    %60 = tpu.dynamic_rotate %58 by %c15_i32_13 dim 1 : vector<16x16x8xf32>, i32 -> vector<16x16x8xf32>
    %61 = arith.select %4, %60, %59 : vector<16x16x8xi1>, vector<16x16x8xf32>
    %62 = arith.addf %58, %61 : vector<16x16x8xf32>
    %63 = arith.select %6, %59, %60 : vector<16x16x8xi1>, vector<16x16x8xf32>
    %64 = arith.addf %62, %63 : vector<16x16x8xf32>
    %65 = vector.extract_strided_slice %64 {offsets = [1, 0, 0], sizes = [1, 16, 8], strides = [1, 1, 1]} : vector<16x16x8xf32> to vector<1x16x8xf32>
    %66 = vector.extract_strided_slice %64 {offsets = [0, 0, 0], sizes = [15, 16, 8], strides = [1, 1, 1]} : vector<16x16x8xf32> to vector<15x16x8xf32>
    %67 = tpu.concatenate %65, %66 in 0 : vector<1x16x8xf32>, vector<15x16x8xf32> -> vector<16x16x8xf32>
    %68 = vector.extract_strided_slice %64 {offsets = [1, 0, 0], sizes = [15, 16, 8], strides = [1, 1, 1]} : vector<16x16x8xf32> to vector<15x16x8xf32>
    %69 = vector.extract_strided_slice %64 {offsets = [14, 0, 0], sizes = [1, 16, 8], strides = [1, 1, 1]} : vector<16x16x8xf32> to vector<1x16x8xf32>
    %70 = tpu.concatenate %68, %69 in 0 : vector<15x16x8xf32>, vector<1x16x8xf32> -> vector<16x16x8xf32>
    %71 = arith.addf %67, %64 : vector<16x16x8xf32>
    %72 = arith.addf %71, %70 : vector<16x16x8xf32>
    %cst_14 = arith.constant 0.111111112 : f32
    %73 = vector.broadcast %cst_14 : f32 to vector<16x16x8xf32>
    %74 = arith.mulf %72, %73 : vector<16x16x8xf32>
    %75 = arith.mulf %38, %38 : vector<16x16x8xf32>
    %76 = arith.subf %74, %75 : vector<16x16x8xf32>
    %77 = arith.mulf %0, %1 : vector<16x16x8xf32>
    %c1_i32_15 = arith.constant 1 : i32
    %78 = tpu.dynamic_rotate %77 by %c1_i32_15 dim 1 : vector<16x16x8xf32>, i32 -> vector<16x16x8xf32>
    %c15_i32_16 = arith.constant 15 : i32
    %79 = tpu.dynamic_rotate %77 by %c15_i32_16 dim 1 : vector<16x16x8xf32>, i32 -> vector<16x16x8xf32>
    %80 = arith.select %4, %79, %78 : vector<16x16x8xi1>, vector<16x16x8xf32>
    %81 = arith.addf %77, %80 : vector<16x16x8xf32>
    %82 = arith.select %6, %78, %79 : vector<16x16x8xi1>, vector<16x16x8xf32>
    %83 = arith.addf %81, %82 : vector<16x16x8xf32>
    %84 = vector.extract_strided_slice %83 {offsets = [1, 0, 0], sizes = [1, 16, 8], strides = [1, 1, 1]} : vector<16x16x8xf32> to vector<1x16x8xf32>
    %85 = vector.extract_strided_slice %83 {offsets = [0, 0, 0], sizes = [15, 16, 8], strides = [1, 1, 1]} : vector<16x16x8xf32> to vector<15x16x8xf32>
    %86 = tpu.concatenate %84, %85 in 0 : vector<1x16x8xf32>, vector<15x16x8xf32> -> vector<16x16x8xf32>
    %87 = vector.extract_strided_slice %83 {offsets = [1, 0, 0], sizes = [15, 16, 8], strides = [1, 1, 1]} : vector<16x16x8xf32> to vector<15x16x8xf32>
    %88 = vector.extract_strided_slice %83 {offsets = [14, 0, 0], sizes = [1, 16, 8], strides = [1, 1, 1]} : vector<16x16x8xf32> to vector<1x16x8xf32>
    %89 = tpu.concatenate %87, %88 in 0 : vector<15x16x8xf32>, vector<1x16x8xf32> -> vector<16x16x8xf32>
    %90 = arith.addf %86, %83 : vector<16x16x8xf32>
    %91 = arith.addf %90, %89 : vector<16x16x8xf32>
    %cst_17 = arith.constant 0.111111112 : f32
    %92 = vector.broadcast %cst_17 : f32 to vector<16x16x8xf32>
    %93 = arith.mulf %91, %92 : vector<16x16x8xf32>
    %94 = arith.mulf %22, %38 : vector<16x16x8xf32>
    %95 = arith.subf %93, %94 : vector<16x16x8xf32>
    %cst_18 = arith.constant 2.000000e+00 : f32
    %96 = vector.broadcast %cst_18 : f32 to vector<16x16x8xf32>
    %97 = arith.mulf %96, %22 : vector<16x16x8xf32>
    %98 = arith.mulf %97, %38 : vector<16x16x8xf32>
    %cst_19 = arith.constant 9.99999974E-5 : f32
    %99 = vector.broadcast %cst_19 : f32 to vector<16x16x8xf32>
    %100 = arith.addf %98, %99 : vector<16x16x8xf32>
    %cst_20 = arith.constant 2.000000e+00 : f32
    %101 = vector.broadcast %cst_20 : f32 to vector<16x16x8xf32>
    %102 = arith.mulf %101, %95 : vector<16x16x8xf32>
    %cst_21 = arith.constant 8.99999984E-4 : f32
    %103 = vector.broadcast %cst_21 : f32 to vector<16x16x8xf32>
    %104 = arith.addf %102, %103 : vector<16x16x8xf32>
    %105 = arith.mulf %100, %104 : vector<16x16x8xf32>
    %106 = arith.mulf %22, %22 : vector<16x16x8xf32>
    %107 = arith.mulf %38, %38 : vector<16x16x8xf32>
    %108 = arith.addf %106, %107 : vector<16x16x8xf32>
    %cst_22 = arith.constant 9.99999974E-5 : f32
    %109 = vector.broadcast %cst_22 : f32 to vector<16x16x8xf32>
    %110 = arith.addf %108, %109 : vector<16x16x8xf32>
    %111 = arith.addf %57, %76 : vector<16x16x8xf32>
    %cst_23 = arith.constant 8.99999984E-4 : f32
    %112 = vector.broadcast %cst_23 : f32 to vector<16x16x8xf32>
    %113 = arith.addf %111, %112 : vector<16x16x8xf32>
    %114 = arith.mulf %110, %113 : vector<16x16x8xf32>
    %115 = tpu.reciprocal %114 : vector<16x16x8xf32> -> vector<16x16x8xf32>
    %116 = arith.mulf %105, %115 : vector<16x16x8xf32>
    %cst_24 = arith.constant 1.000000e+00 : f32
    %117 = vector.broadcast %cst_24 : f32 to vector<16x16x8xf32>
    %118 = arith.subf %117, %116 : vector<16x16x8xf32>
    %cst_25 = arith.constant 5.000000e-01 : f32
    %119 = vector.broadcast %cst_25 : f32 to vector<16x16x8xf32>
    %120 = arith.mulf %118, %119 : vector<16x16x8xf32>
    %cst_26 = arith.constant 0.000000e+00 : f32
    %cst_27 = arith.constant 1.000000e+00 : f32
    %121 = vector.broadcast %cst_26 : f32 to vector<16x16x8xf32>
    %122 = arith.maximumf %121, %120 : vector<16x16x8xf32>
    %123 = vector.broadcast %cst_27 : f32 to vector<16x16x8xf32>
    %124 = arith.minimumf %123, %122 : vector<16x16x8xf32>
    %c0_28 = arith.constant 0 : index
    %c0_29 = arith.constant 0 : index
    %c0_30 = arith.constant 0 : index
    %125 = vector.load %arg3[%c0_28, %c0_29, %c0_30] : memref<16x16x8xf32, #tpu.memory_space<vmem>>, vector<16x16x8xf32>
    tpu.vector_store %arg3[%c0_28, %c0_29, %c0_30], %124 {strides = array<i32>} : memref<16x16x8xf32, #tpu.memory_space<vmem>>, vector<16x16x8xf32>,
    return
  }
  func.func @transform_0(%arg0: i32) -> (i32, i32, i32) {
    %c0_i32 = arith.constant 0 : i32
    %c0_i32_0 = arith.constant 0 : i32
    %c0_i32_1 = arith.constant 0 : i32
    return %c0_i32, %c0_i32_0, %arg0 : i32, i32, i32
  }
  func.func @transform_1(%arg0: i32) -> (i32, i32, i32) {
    %c0_i32 = arith.constant 0 : i32
    %c0_i32_0 = arith.constant 0 : i32
    %c0_i32_1 = arith.constant 0 : i32
    return %c0_i32, %c0_i32_0, %arg0 : i32, i32, i32
  }
  func.func @transform_2(%arg0: i32) -> (i32, i32, i32) {
    %c0_i32 = arith.constant 0 : i32
    %c0_i32_0 = arith.constant 0 : i32
    %c0_i32_1 = arith.constant 0 : i32
    return %c0_i32, %c0_i32_0, %arg0 : i32, i32, i32
  }
}

</mosaic_0001>

<llo_original>
// kernel: tpu_custom_call.1
$region0: #{tpu_custom_call.1}
  #allocation0 [shape = 'u32[]', space=smem, size = 0x4, offset = 0x4, fixed_abs, tag = 'smem constant byte address 0x4 - core index']
  #allocation1 [shape = 'u32[144,128]{1,0:T(1,128)}', space=vmem, size = 0x12000, scoped, tag = 'internal scratch']
  %s0 = inlined_call_operand.vmem [shape: f32[16,16,8], index: 0, kind: input, shape index: {}]
  %s1 = inlined_call_operand.vmem [shape: f32[16,16,8], index: 1, kind: input, shape index: {}]
  %s2 = inlined_call_operand.vmem [shape: f32[16,16,8], index: 2, kind: output, shape index: {}]
  %s3 = sld [smem:[#allocation0]]
  $region18: #{tpu_custom_call.1} parent=0
    _
  %s5 = ssub.s32 1, %s3
  %s6 = scalar_select 0, %s5, %s3
  // Predicated region
  $region2: #{tpu_custom_call.1} parent=0 // pred_check
    _
  $region3: #{tpu_custom_call.1} parent=0 // pred_check_branch
    %8 = sbr.rel (0) target = $region5
  $region4: #{tpu_custom_call.1} parent=0 // pred_region
    _
  $region5: #{tpu_custom_call.1} parent=0 // pred_fallthru
    _
  // Predicated region
  $region6: #{tpu_custom_call.1} parent=0 // pred_check
    _
  $region7: #{tpu_custom_call.1} parent=0 // pred_check_branch
    %10 = sbr.rel (0) target = $region9
  $region8: #{tpu_custom_call.1} parent=0 // pred_region
    _
  $region9: #{tpu_custom_call.1} parent=0 // pred_fallthru
    _
  %v11 = vld [vmem:[%s0] sm:$0xff]
  %v12 = vld [vmem:[%s0 + $0x8] sm:$0xff]
  %v13 = vld [vmem:[%s0 + $0x10] sm:$0xff]
  %v14 = vld [vmem:[%s0 + $0x18] sm:$0xff]
  %v15 = vld [vmem:[%s0 + $0x20] sm:$0xff]
  %v16 = vld [vmem:[%s0 + $0x28] sm:$0xff]
  %v17 = vld [vmem:[%s0 + $0x30] sm:$0xff]
  %v18 = vld [vmem:[%s0 + $0x38] sm:$0xff]
  %v19 = vld [vmem:[%s0 + $0x40] sm:$0xff]
  %v20 = vld [vmem:[%s0 + $0x48] sm:$0xff]
  %v21 = vld [vmem:[%s0 + $0x50] sm:$0xff]
  %v22 = vld [vmem:[%s0 + $0x58] sm:$0xff]
  %v23 = vld [vmem:[%s0 + $0x60] sm:$0xff]
  %v24 = vld [vmem:[%s0 + $0x68] sm:$0xff]
  %v25 = vld [vmem:[%s0 + $0x70] sm:$0xff]
  %v26 = vld [vmem:[%s0 + $0x78] sm:$0xff]
  %v27 = vld [vmem:[%s0 + $0x80] sm:$0xff]
  %v28 = vld [vmem:[%s0 + $0x88] sm:$0xff]
  %v29 = vld [vmem:[%s0 + $0x90] sm:$0xff]
  %v30 = vld [vmem:[%s0 + $0x98] sm:$0xff]
  %v31 = vld [vmem:[%s0 + $0xa0] sm:$0xff]
  %v32 = vld [vmem:[%s0 + $0xa8] sm:$0xff]
  %v33 = vld [vmem:[%s0 + $0xb0] sm:$0xff]
  %v34 = vld [vmem:[%s0 + $0xb8] sm:$0xff]
  %v35 = vld [vmem:[%s0 + $0xc0] sm:$0xff]
  %v36 = vld [vmem:[%s0 + $0xc8] sm:$0xff]
  %v37 = vld [vmem:[%s0 + $0xd0] sm:$0xff]
  %v38 = vld [vmem:[%s0 + $0xd8] sm:$0xff]
  %v39 = vld [vmem:[%s0 + $0xe0] sm:$0xff]
  %v40 = vld [vmem:[%s0 + $0xe8] sm:$0xff]
  %v41 = vld [vmem:[%s0 + $0xf0] sm:$0xff]
  %v42 = vld [vmem:[%s0 + $0xf8] sm:$0xff]
  %v43 = vld [vmem:[%s1] sm:$0xff]
  %v44 = vld [vmem:[%s1 + $0x8] sm:$0xff]
  %v45 = vld [vmem:[%s1 + $0x10] sm:$0xff]
  %v46 = vld [vmem:[%s1 + $0x18] sm:$0xff]
  %v47 = vld [vmem:[%s1 + $0x20] sm:$0xff]
  %v48 = vld [vmem:[%s1 + $0x28] sm:$0xff]
  %v49 = vld [vmem:[%s1 + $0x30] sm:$0xff]
  %v50 = vld [vmem:[%s1 + $0x38] sm:$0xff]
  %v51 = vld [vmem:[%s1 + $0x40] sm:$0xff]
  %v52 = vld [vmem:[%s1 + $0x48] sm:$0xff]
  %v53 = vld [vmem:[%s1 + $0x50] sm:$0xff]
  %v54 = vld [vmem:[%s1 + $0x58] sm:$0xff]
  %v55 = vld [vmem:[%s1 + $0x60] sm:$0xff]
  %v56 = vld [vmem:[%s1 + $0x68] sm:$0xff]
  %v57 = vld [vmem:[%s1 + $0x70] sm:$0xff]
  %v58 = vld [vmem:[%s1 + $0x78] sm:$0xff]
  %v59 = vld [vmem:[%s1 + $0x80] sm:$0xff]
  %v60 = vld [vmem:[%s1 + $0x88] sm:$0xff]
  %v61 = vld [vmem:[%s1 + $0x90] sm:$0xff]
  %v62 = vld [vmem:[%s1 + $0x98] sm:$0xff]
  %v63 = vld [vmem:[%s1 + $0xa0] sm:$0xff]
  %v64 = vld [vmem:[%s1 + $0xa8] sm:$0xff]
  %v65 = vld [vmem:[%s1 + $0xb0] sm:$0xff]
  %v66 = vld [vmem:[%s1 + $0xb8] sm:$0xff]
  %v67 = vld [vmem:[%s1 + $0xc0] sm:$0xff]
  %v68 = vld [vmem:[%s1 + $0xc8] sm:$0xff]
  %v69 = vld [vmem:[%s1 + $0xd0] sm:$0xff]
  %v70 = vld [vmem:[%s1 + $0xd8] sm:$0xff]
  %v71 = vld [vmem:[%s1 + $0xe0] sm:$0xff]
  %v72 = vld [vmem:[%s1 + $0xe8] sm:$0xff]
  %v73 = vld [vmem:[%s1 + $0xf0] sm:$0xff]
  %v74 = vld [vmem:[%s1 + $0xf8] sm:$0xff]
  %v75 = vlaneseq
  %v76 = vshrl.u32 %v75, 7
  %v77 = vadd.s32 %v76, 8
  %vm78 = vcmp.eq.s32.totalorder %v76, 0
  %vm79 = vcmp.eq.s32.totalorder %v77, 0
  %vm80 = vcmp.eq.s32.totalorder %v76, 15
  %vm81 = vcmp.eq.s32.totalorder %v77, 15
  %v82 = vrot.slane %v11, 7
  %v83 = vrot.slane %v13, 7
  %v84 = vrot.slane %v15, 7
  %v85 = vrot.slane %v17, 7
  %v86 = vrot.slane %v19, 7
  %v87 = vrot.slane %v21, 7
  %v88 = vrot.slane %v23, 7
  %v89 = vrot.slane %v25, 7
  %v90 = vrot.slane %v27, 7
  %v91 = vrot.slane %v29, 7
  %v92 = vrot.slane %v31, 7
  %v93 = vrot.slane %v33, 7
  %v94 = vrot.slane %v35, 7
  %v95 = vrot.slane %v37, 7
  %v96 = vrot.slane %v39, 7
  %v97 = vrot.slane %v41, 7
  %v98 = vrot.slane %v12, 7
  %v99 = vrot.slane %v14, 7
  %v100 = vrot.slane %v16, 7
  %v101 = vrot.slane %v18, 7
  %v102 = vrot.slane %v20, 7
  %v103 = vrot.slane %v22, 7
  %v104 = vrot.slane %v24, 7
  %v105 = vrot.slane %v26, 7
  %v106 = vrot.slane %v28, 7
  %v107 = vrot.slane %v30, 7
  %v108 = vrot.slane %v32, 7
  %v109 = vrot.slane %v34, 7
  %v110 = vrot.slane %v36, 7
  %v111 = vrot.slane %v38, 7
  %v112 = vrot.slane %v40, 7
  %v113 = vrot.slane %v42, 7
  %vm114 = vcmp.lt.s32.totalorder %v76, 1
  %v115 = vsel %vm114, %v82, %v98
  %v116 = vsel %vm114, %v83, %v99
  %v117 = vsel %vm114, %v84, %v100
  %v118 = vsel %vm114, %v85, %v101
  %v119 = vsel %vm114, %v86, %v102
  %v120 = vsel %vm114, %v87, %v103
  %v121 = vsel %vm114, %v88, %v104
  %v122 = vsel %vm114, %v89, %v105
  %v123 = vsel %vm114, %v90, %v106
  %v124 = vsel %vm114, %v91, %v107
  %v125 = vsel %vm114, %v92, %v108
  %v126 = vsel %vm114, %v93, %v109
  %v127 = vsel %vm114, %v94, %v110
  %v128 = vsel %vm114, %v95, %v111
  %v129 = vsel %vm114, %v96, %v112
  %v130 = vsel %vm114, %v97, %v113
  %v131 = vsel %vm114, %v98, %v82
  %v132 = vsel %vm114, %v99, %v83
  %v133 = vsel %vm114, %v100, %v84
  %v134 = vsel %vm114, %v101, %v85
  %v135 = vsel %vm114, %v102, %v86
  %v136 = vsel %vm114, %v103, %v87
  %v137 = vsel %vm114, %v104, %v88
  %v138 = vsel %vm114, %v105, %v89
  %v139 = vsel %vm114, %v106, %v90
  %v140 = vsel %vm114, %v107, %v91
  %v141 = vsel %vm114, %v108, %v92
  %v142 = vsel %vm114, %v109, %v93
  %v143 = vsel %vm114, %v110, %v94
  %v144 = vsel %vm114, %v111, %v95
  %v145 = vsel %vm114, %v112, %v96
  %v146 = vsel %vm114, %v113, %v97
  %v147 = vrot.slane %v11, 1
  %v148 = vrot.slane %v13, 1
  %v149 = vrot.slane %v15, 1
  %v150 = vrot.slane %v17, 1
  %v151 = vrot.slane %v19, 1
  %v152 = vrot.slane %v21, 1
  %v153 = vrot.slane %v23, 1
  %v154 = vrot.slane %v25, 1
  %v155 = vrot.slane %v27, 1
  %v156 = vrot.slane %v29, 1
  %v157 = vrot.slane %v31, 1
  %v158 = vrot.slane %v33, 1
  %v159 = vrot.slane %v35, 1
  %v160 = vrot.slane %v37, 1
  %v161 = vrot.slane %v39, 1
  %v162 = vrot.slane %v41, 1
  %v163 = vrot.slane %v12, 1
  %v164 = vrot.slane %v14, 1
  %v165 = vrot.slane %v16, 1
  %v166 = vrot.slane %v18, 1
  %v167 = vrot.slane %v20, 1
  %v168 = vrot.slane %v22, 1
  %v169 = vrot.slane %v24, 1
  %v170 = vrot.slane %v26, 1
  %v171 = vrot.slane %v28, 1
  %v172 = vrot.slane %v30, 1
  %v173 = vrot.slane %v32, 1
  %v174 = vrot.slane %v34, 1
  %v175 = vrot.slane %v36, 1
  %v176 = vrot.slane %v38, 1
  %v177 = vrot.slane %v40, 1
  %v178 = vrot.slane %v42, 1
  %vm179 = vcmp.lt.s32.totalorder %v76, 7
  %v180 = vsel %vm179, %v147, %v163
  %v181 = vsel %vm179, %v148, %v164
  %v182 = vsel %vm179, %v149, %v165
  %v183 = vsel %vm179, %v150, %v166
  %v184 = vsel %vm179, %v151, %v167
  %v185 = vsel %vm179, %v152, %v168
  %v186 = vsel %vm179, %v153, %v169
  %v187 = vsel %vm179, %v154, %v170
  %v188 = vsel %vm179, %v155, %v171
  %v189 = vsel %vm179, %v156, %v172
  %v190 = vsel %vm179, %v157, %v173
  %v191 = vsel %vm179, %v158, %v174
  %v192 = vsel %vm179, %v159, %v175
  %v193 = vsel %vm179, %v160, %v176
  %v194 = vsel %vm179, %v161, %v177
  %v195 = vsel %vm179, %v162, %v178
  %v196 = vsel %vm179, %v163, %v147
  %v197 = vsel %vm179, %v164, %v148
  %v198 = vsel %vm179, %v165, %v149
  %v199 = vsel %vm179, %v166, %v150
  %v200 = vsel %vm179, %v167, %v151
  %v201 = vsel %vm179, %v168, %v152
  %v202 = vsel %vm179, %v169, %v153
  %v203 = vsel %vm179, %v170, %v154
  %v204 = vsel %vm179, %v171, %v155
  %v205 = vsel %vm179, %v172, %v156
  %v206 = vsel %vm179, %v173, %v157
  %v207 = vsel %vm179, %v174, %v158
  %v208 = vsel %vm179, %v175, %v159
  %v209 = vsel %vm179, %v176, %v160
  %v210 = vsel %vm179, %v177, %v161
  %v211 = vsel %vm179, %v178, %v162
  %v212 = vsel %vm78, %v180, %v131
  %v213 = vsel %vm79, %v196, %v115
  %v214 = vsel %vm78, %v181, %v132
  %v215 = vsel %vm79, %v197, %v116
  %v216 = vsel %vm78, %v182, %v133
  %v217 = vsel %vm79, %v198, %v117
  %v218 = vsel %vm78, %v183, %v134
  %v219 = vsel %vm79, %v199, %v118
  %v220 = vsel %vm78, %v184, %v135
  %v221 = vsel %vm79, %v200, %v119
  %v222 = vsel %vm78, %v185, %v136
  %v223 = vsel %vm79, %v201, %v120
  %v224 = vsel %vm78, %v186, %v137
  %v225 = vsel %vm79, %v202, %v121
  %v226 = vsel %vm78, %v187, %v138
  %v227 = vsel %vm79, %v203, %v122
  %v228 = vsel %vm78, %v188, %v139
  %v229 = vsel %vm79, %v204, %v123
  %v230 = vsel %vm78, %v189, %v140
  %v231 = vsel %vm79, %v205, %v124
  %v232 = vsel %vm78, %v190, %v141
  %v233 = vsel %vm79, %v206, %v125
  %v234 = vsel %vm78, %v191, %v142
  %v235 = vsel %vm79, %v207, %v126
  %v236 = vsel %vm78, %v192, %v143
  %v237 = vsel %vm79, %v208, %v127
  %v238 = vsel %vm78, %v193, %v144
  %v239 = vsel %vm79, %v209, %v128
  %v240 = vsel %vm78, %v194, %v145
  %v241 = vsel %vm79, %v210, %v129
  %v242 = vsel %vm78, %v195, %v146
  %v243 = vsel %vm79, %v211, %v130
  %v244 = vadd.f32 %v11, %v212
  %v245 = vadd.f32 %v12, %v213
  %v246 = vadd.f32 %v13, %v214
  %v247 = vadd.f32 %v14, %v215
  %v248 = vadd.f32 %v15, %v216
  %v249 = vadd.f32 %v16, %v217
  %v250 = vadd.f32 %v17, %v218
  %v251 = vadd.f32 %v18, %v219
  %v252 = vadd.f32 %v19, %v220
  %v253 = vadd.f32 %v20, %v221
  %v254 = vadd.f32 %v21, %v222
  %v255 = vadd.f32 %v22, %v223
  %v256 = vadd.f32 %v23, %v224
  %v257 = vadd.f32 %v24, %v225
  %v258 = vadd.f32 %v25, %v226
  %v259 = vadd.f32 %v26, %v227
  %v260 = vadd.f32 %v27, %v228
  %v261 = vadd.f32 %v28, %v229
  %v262 = vadd.f32 %v29, %v230
  %v263 = vadd.f32 %v30, %v231
  %v264 = vadd.f32 %v31, %v232
  %v265 = vadd.f32 %v32, %v233
  %v266 = vadd.f32 %v33, %v234
  %v267 = vadd.f32 %v34, %v235
  %v268 = vadd.f32 %v35, %v236
  %v269 = vadd.f32 %v36, %v237
  %v270 = vadd.f32 %v37, %v238
  %v271 = vadd.f32 %v38, %v239
  %v272 = vadd.f32 %v39, %v240
  %v273 = vadd.f32 %v40, %v241
  %v274 = vadd.f32 %v41, %v242
  %v275 = vadd.f32 %v42, %v243
  %v276 = vsel %vm80, %v131, %v180
  %v277 = vsel %vm81, %v115, %v196
  %v278 = vsel %vm80, %v132, %v181
  %v279 = vsel %vm81, %v116, %v197
  %v280 = vsel %vm80, %v133, %v182
  %v281 = vsel %vm81, %v117, %v198
  %v282 = vsel %vm80, %v134, %v183
  %v283 = vsel %vm81, %v118, %v199
  %v284 = vsel %vm80, %v135, %v184
  %v285 = vsel %vm81, %v119, %v200
  %v286 = vsel %vm80, %v136, %v185
  %v287 = vsel %vm81, %v120, %v201
  %v288 = vsel %vm80, %v137, %v186
  %v289 = vsel %vm81, %v121, %v202
  %v290 = vsel %vm80, %v138, %v187
  %v291 = vsel %vm81, %v122, %v203
  %v292 = vsel %vm80, %v139, %v188
  %v293 = vsel %vm81, %v123, %v204
  %v294 = vsel %vm80, %v140, %v189
  %v295 = vsel %vm81, %v124, %v205
  %v296 = vsel %vm80, %v141, %v190
  %v297 = vsel %vm81, %v125, %v206
  %v298 = vsel %vm80, %v142, %v191
  %v299 = vsel %vm81, %v126, %v207
  %v300 = vsel %vm80, %v143, %v192
  %v301 = vsel %vm81, %v127, %v208
  %v302 = vsel %vm80, %v144, %v193
  %v303 = vsel %vm81, %v128, %v209
  %v304 = vsel %vm80, %v145, %v194
  %v305 = vsel %vm81, %v129, %v210
  %v306 = vsel %vm80, %v146, %v195
  %v307 = vsel %vm81, %v130, %v211
  %v308 = vadd.f32 %v244, %v276
  %v309 = vadd.f32 %v245, %v277
  %v310 = vadd.f32 %v246, %v278
  %v311 = vadd.f32 %v247, %v279
  %v312 = vadd.f32 %v248, %v280
  %v313 = vadd.f32 %v249, %v281
  %v314 = vadd.f32 %v250, %v282
  %v315 = vadd.f32 %v251, %v283
  %v316 = vadd.f32 %v252, %v284
  %v317 = vadd.f32 %v253, %v285
  %v318 = vadd.f32 %v254, %v286
  %v319 = vadd.f32 %v255, %v287
  %v320 = vadd.f32 %v256, %v288
  %v321 = vadd.f32 %v257, %v289
  %v322 = vadd.f32 %v258, %v290
  %v323 = vadd.f32 %v259, %v291
  %v324 = vadd.f32 %v260, %v292
  %v325 = vadd.f32 %v261, %v293
  %v326 = vadd.f32 %v262, %v294
  %v327 = vadd.f32 %v263, %v295
  %v328 = vadd.f32 %v264, %v296
  %v329 = vadd.f32 %v265, %v297
  %v330 = vadd.f32 %v266, %v298
  %v331 = vadd.f32 %v267, %v299
  %v332 = vadd.f32 %v268, %v300
  %v333 = vadd.f32 %v269, %v301
  %v334 = vadd.f32 %v270, %v302
  %v335 = vadd.f32 %v271, %v303
  %v336 = vadd.f32 %v272, %v304
  %v337 = vadd.f32 %v273, %v305
  %v338 = vadd.f32 %v274, %v306
  %v339 = vadd.f32 %v275, %v307
  %v340 = vadd.f32 %v310, %v308
  %v341 = vadd.f32 %v311, %v309
  %v342 = vadd.f32 %v310, %v312
  %v343 = vadd.f32 %v311, %v313
  %v344 = vadd.f32 %v312, %v314
  %v345 = vadd.f32 %v313, %v315
  %v346 = vadd.f32 %v314, %v316
  %v347 = vadd.f32 %v315, %v317
  %v348 = vadd.f32 %v316, %v318
  %v349 = vadd.f32 %v317, %v319
  %v350 = vadd.f32 %v318, %v320
  %v351 = vadd.f32 %v319, %v321
  %v352 = vadd.f32 %v320, %v322
  %v353 = vadd.f32 %v321, %v323
  %v354 = vadd.f32 %v322, %v324
  %v355 = vadd.f32 %v323, %v325
  %v356 = vadd.f32 %v324, %v326
  %v357 = vadd.f32 %v325, %v327
  %v358 = vadd.f32 %v326, %v328
  %v359 = vadd.f32 %v327, %v329
  %v360 = vadd.f32 %v328, %v330
  %v361 = vadd.f32 %v329, %v331
  %v362 = vadd.f32 %v330, %v332
  %v363 = vadd.f32 %v331, %v333
  %v364 = vadd.f32 %v332, %v334
  %v365 = vadd.f32 %v333, %v335
  %v366 = vadd.f32 %v334, %v336
  %v367 = vadd.f32 %v335, %v337
  %v368 = vadd.f32 %v336, %v338
  %v369 = vadd.f32 %v337, %v339
  %v370 = vadd.f32 %v340, %v310
  %v371 = vadd.f32 %v341, %v311
  %v372 = vadd.f32 %v340, %v312
  %v373 = vadd.f32 %v341, %v313
  %v374 = vadd.f32 %v342, %v314
  %v375 = vadd.f32 %v343, %v315
  %v376 = vadd.f32 %v344, %v316
  %v377 = vadd.f32 %v345, %v317
  %v378 = vadd.f32 %v346, %v318
  %v379 = vadd.f32 %v347, %v319
  %v380 = vadd.f32 %v348, %v320
  %v381 = vadd.f32 %v349, %v321
  %v382 = vadd.f32 %v350, %v322
  %v383 = vadd.f32 %v351, %v323
  %v384 = vadd.f32 %v352, %v324
  %v385 = vadd.f32 %v353, %v325
  %v386 = vadd.f32 %v354, %v326
  %v387 = vadd.f32 %v355, %v327
  %v388 = vadd.f32 %v356, %v328
  %v389 = vadd.f32 %v357, %v329
  %v390 = vadd.f32 %v358, %v330
  %v391 = vadd.f32 %v359, %v331
  %v392 = vadd.f32 %v360, %v332
  %v393 = vadd.f32 %v361, %v333
  %v394 = vadd.f32 %v362, %v334
  %v395 = vadd.f32 %v363, %v335
  %v396 = vadd.f32 %v364, %v336
  %v397 = vadd.f32 %v365, %v337
  %v398 = vadd.f32 %v366, %v338
  %v399 = vadd.f32 %v367, %v339
  %v400 = vadd.f32 %v368, %v336
  %v401 = vadd.f32 %v369, %v337
  %v402 = vmul.f32 %v370, 0.11111111
  %v403 = vmul.f32 %v371, 0.11111111
  %v404 = vmul.f32 %v372, 0.11111111
  %v405 = vmul.f32 %v373, 0.11111111
  %v406 = vmul.f32 %v374, 0.11111111
  %v407 = vmul.f32 %v375, 0.11111111
  %v408 = vmul.f32 %v376, 0.11111111
  %v409 = vmul.f32 %v377, 0.11111111
  %v410 = vmul.f32 %v378, 0.11111111
  %v411 = vmul.f32 %v379, 0.11111111
  %v412 = vmul.f32 %v380, 0.11111111
  %v413 = vmul.f32 %v381, 0.11111111
  %v414 = vmul.f32 %v382, 0.11111111
  %v415 = vmul.f32 %v383, 0.11111111
  %v416 = vmul.f32 %v384, 0.11111111
  %v417 = vmul.f32 %v385, 0.11111111
  %v418 = vmul.f32 %v386, 0.11111111
  %v419 = vmul.f32 %v387, 0.11111111
  %v420 = vmul.f32 %v388, 0.11111111
  %v421 = vmul.f32 %v389, 0.11111111
  %v422 = vmul.f32 %v390, 0.11111111
  %v423 = vmul.f32 %v391, 0.11111111
  %v424 = vmul.f32 %v392, 0.11111111
  %v425 = vmul.f32 %v393, 0.11111111
  %v426 = vmul.f32 %v394, 0.11111111
  %v427 = vmul.f32 %v395, 0.11111111
  %v428 = vmul.f32 %v396, 0.11111111
  %v429 = vmul.f32 %v397, 0.11111111
  %v430 = vmul.f32 %v398, 0.11111111
  %v431 = vmul.f32 %v399, 0.11111111
  %v432 = vmul.f32 %v400, 0.11111111
  %v433 = vmul.f32 %v401, 0.11111111
  %v434 = vrot.slane %v43, 7
  %v435 = vrot.slane %v45, 7
  %v436 = vrot.slane %v47, 7
  %v437 = vrot.slane %v49, 7
  %v438 = vrot.slane %v51, 7
  %v439 = vrot.slane %v53, 7
  %v440 = vrot.slane %v55, 7
  %v441 = vrot.slane %v57, 7
  %v442 = vrot.slane %v59, 7
  %v443 = vrot.slane %v61, 7
  %v444 = vrot.slane %v63, 7
  %v445 = vrot.slane %v65, 7
  %v446 = vrot.slane %v67, 7
  %v447 = vrot.slane %v69, 7
  %v448 = vrot.slane %v71, 7
  %v449 = vrot.slane %v73, 7
  %v450 = vrot.slane %v44, 7
  %v451 = vrot.slane %v46, 7
  %v452 = vrot.slane %v48, 7
  %v453 = vrot.slane %v50, 7
  %v454 = vrot.slane %v52, 7
  %v455 = vrot.slane %v54, 7
  %v456 = vrot.slane %v56, 7
  %v457 = vrot.slane %v58, 7
  %v458 = vrot.slane %v60, 7
  %v459 = vrot.slane %v62, 7
  %v460 = vrot.slane %v64, 7
  %v461 = vrot.slane %v66, 7
  %v462 = vrot.slane %v68, 7
  %v463 = vrot.slane %v70, 7
  %v464 = vrot.slane %v72, 7
  %v465 = vrot.slane %v74, 7
  %v466 = vsel %vm114, %v434, %v450
  %v467 = vsel %vm114, %v435, %v451
  %v468 = vsel %vm114, %v436, %v452
  %v469 = vsel %vm114, %v437, %v453
  %v470 = vsel %vm114, %v438, %v454
  %v471 = vsel %vm114, %v439, %v455
  %v472 = vsel %vm114, %v440, %v456
  %v473 = vsel %vm114, %v441, %v457
  %v474 = vsel %vm114, %v442, %v458
  %v475 = vsel %vm114, %v443, %v459
  %v476 = vsel %vm114, %v444, %v460
  %v477 = vsel %vm114, %v445, %v461
  %v478 = vsel %vm114, %v446, %v462
  %v479 = vsel %vm114, %v447, %v463
  %v480 = vsel %vm114, %v448, %v464
  %v481 = vsel %vm114, %v449, %v465
  %v482 = vsel %vm114, %v450, %v434
  %v483 = vsel %vm114, %v451, %v435
  %v484 = vsel %vm114, %v452, %v436
  %v485 = vsel %vm114, %v453, %v437
  %v486 = vsel %vm114, %v454, %v438
  %v487 = vsel %vm114, %v455, %v439
  %v488 = vsel %vm114, %v456, %v440
  %v489 = vsel %vm114, %v457, %v441
  %v490 = vsel %vm114, %v458, %v442
  %v491 = vsel %vm114, %v459, %v443
  %v492 = vsel %vm114, %v460, %v444
  %v493 = vsel %vm114, %v461, %v445
  %v494 = vsel %vm114, %v462, %v446
  %v495 = vsel %vm114, %v463, %v447
  %v496 = vsel %vm114, %v464, %v448
  %v497 = vsel %vm114, %v465, %v449
  %v498 = vrot.slane %v43, 1
  %v499 = vrot.slane %v45, 1
  %v500 = vrot.slane %v47, 1
  %v501 = vrot.slane %v49, 1
  %v502 = vrot.slane %v51, 1
  %v503 = vrot.slane %v53, 1
  %v504 = vrot.slane %v55, 1
  %v505 = vrot.slane %v57, 1
  %v506 = vrot.slane %v59, 1
  %v507 = vrot.slane %v61, 1
  %v508 = vrot.slane %v63, 1
  %v509 = vrot.slane %v65, 1
  %v510 = vrot.slane %v67, 1
  %v511 = vrot.slane %v69, 1
  %v512 = vrot.slane %v71, 1
  %v513 = vrot.slane %v73, 1
  %v514 = vrot.slane %v44, 1
  %v515 = vrot.slane %v46, 1
  %v516 = vrot.slane %v48, 1
  %v517 = vrot.slane %v50, 1
  %v518 = vrot.slane %v52, 1
  %v519 = vrot.slane %v54, 1
  %v520 = vrot.slane %v56, 1
  %v521 = vrot.slane %v58, 1
  %v522 = vrot.slane %v60, 1
  %v523 = vrot.slane %v62, 1
  %v524 = vrot.slane %v64, 1
  %v525 = vrot.slane %v66, 1
  %v526 = vrot.slane %v68, 1
  %v527 = vrot.slane %v70, 1
  %v528 = vrot.slane %v72, 1
  %v529 = vrot.slane %v74, 1
  %v530 = vsel %vm179, %v498, %v514
  %v531 = vsel %vm179, %v499, %v515
  %v532 = vsel %vm179, %v500, %v516
  %v533 = vsel %vm179, %v501, %v517
  %v534 = vsel %vm179, %v502, %v518
  %v535 = vsel %vm179, %v503, %v519
  %v536 = vsel %vm179, %v504, %v520
  %v537 = vsel %vm179, %v505, %v521
  %v538 = vsel %vm179, %v506, %v522
  %v539 = vsel %vm179, %v507, %v523
  %v540 = vsel %vm179, %v508, %v524
  %v541 = vsel %vm179, %v509, %v525
  %v542 = vsel %vm179, %v510, %v526
  %v543 = vsel %vm179, %v511, %v527
  %v544 = vsel %vm179, %v512, %v528
  %v545 = vsel %vm179, %v513, %v529
  %v546 = vsel %vm179, %v514, %v498
  %v547 = vsel %vm179, %v515, %v499
  %v548 = vsel %vm179, %v516, %v500
  %v549 = vsel %vm179, %v517, %v501
  %v550 = vsel %vm179, %v518, %v502
  %v551 = vsel %vm179, %v519, %v503
  %v552 = vsel %vm179, %v520, %v504
  %v553 = vsel %vm179, %v521, %v505
  %v554 = vsel %vm179, %v522, %v506
  %v555 = vsel %vm179, %v523, %v507
  %v556 = vsel %vm179, %v524, %v508
  %v557 = vsel %vm179, %v525, %v509
  %v558 = vsel %vm179, %v526, %v510
  %v559 = vsel %vm179, %v527, %v511
  %v560 = vsel %vm179, %v528, %v512
  %v561 = vsel %vm179, %v529, %v513
  %v562 = vsel %vm78, %v530, %v482
  %v563 = vsel %vm79, %v546, %v466
  %v564 = vsel %vm78, %v531, %v483
  %v565 = vsel %vm79, %v547, %v467
  %v566 = vsel %vm78, %v532, %v484
  %v567 = vsel %vm79, %v548, %v468
  %v568 = vsel %vm78, %v533, %v485
  %v569 = vsel %vm79, %v549, %v469
  %v570 = vsel %vm78, %v534, %v486
  %v571 = vsel %vm79, %v550, %v470
  %v572 = vsel %vm78, %v535, %v487
  %v573 = vsel %vm79, %v551, %v471
  %v574 = vsel %vm78, %v536, %v488
  %v575 = vsel %vm79, %v552, %v472
  %v576 = vsel %vm78, %v537, %v489
  %v577 = vsel %vm79, %v553, %v473
  %v578 = vsel %vm78, %v538, %v490
  %v579 = vsel %vm79, %v554, %v474
  %v580 = vsel %vm78, %v539, %v491
  %v581 = vsel %vm79, %v555, %v475
  %v582 = vsel %vm78, %v540, %v492
  %v583 = vsel %vm79, %v556, %v476
  %v584 = vsel %vm78, %v541, %v493
  %v585 = vsel %vm79, %v557, %v477
  %v586 = vsel %vm78, %v542, %v494
  %v587 = vsel %vm79, %v558, %v478
  %v588 = vsel %vm78, %v543, %v495
  %v589 = vsel %vm79, %v559, %v479
  %v590 = vsel %vm78, %v544, %v496
  %v591 = vsel %vm79, %v560, %v480
  %v592 = vsel %vm78, %v545, %v497
  %v593 = vsel %vm79, %v561, %v481
  %v594 = vadd.f32 %v43, %v562
  %v595 = vadd.f32 %v44, %v563
  %v596 = vadd.f32 %v45, %v564
  %v597 = vadd.f32 %v46, %v565
  %v598 = vadd.f32 %v47, %v566
  %v599 = vadd.f32 %v48, %v567
  %v600 = vadd.f32 %v49, %v568
  %v601 = vadd.f32 %v50, %v569
  %v602 = vadd.f32 %v51, %v570
  %v603 = vadd.f32 %v52, %v571
  %v604 = vadd.f32 %v53, %v572
  %v605 = vadd.f32 %v54, %v573
  %v606 = vadd.f32 %v55, %v574
  %v607 = vadd.f32 %v56, %v575
  %v608 = vadd.f32 %v57, %v576
  %v609 = vadd.f32 %v58, %v577
  %v610 = vadd.f32 %v59, %v578
  %v611 = vadd.f32 %v60, %v579
  %v612 = vadd.f32 %v61, %v580
  %v613 = vadd.f32 %v62, %v581
  %v614 = vadd.f32 %v63, %v582
  %v615 = vadd.f32 %v64, %v583
  %v616 = vadd.f32 %v65, %v584
  %v617 = vadd.f32 %v66, %v585
  %v618 = vadd.f32 %v67, %v586
  %v619 = vadd.f32 %v68, %v587
  %v620 = vadd.f32 %v69, %v588
  %v621 = vadd.f32 %v70, %v589
  %v622 = vadd.f32 %v71, %v590
  %v623 = vadd.f32 %v72, %v591
  %v624 = vadd.f32 %v73, %v592
  %v625 = vadd.f32 %v74, %v593
  %v626 = vsel %vm80, %v482, %v530
  %v627 = vsel %vm81, %v466, %v546
  %v628 = vsel %vm80, %v483, %v531
  %v629 = vsel %vm81, %v467, %v547
  %v630 = vsel %vm80, %v484, %v532
  %v631 = vsel %vm81, %v468, %v548
  %v632 = vsel %vm80, %v485, %v533
  %v633 = vsel %vm81, %v469, %v549
  %v634 = vsel %vm80, %v486, %v534
  %v635 = vsel %vm81, %v470, %v550
  %v636 = vsel %vm80, %v487, %v535
  %v637 = vsel %vm81, %v471, %v551
  %v638 = vsel %vm80, %v488, %v536
  %v639 = vsel %vm81, %v472, %v552
  %v640 = vsel %vm80, %v489, %v537
  %v641 = vsel %vm81, %v473, %v553
  %v642 = vsel %vm80, %v490, %v538
  %v643 = vsel %vm81, %v474, %v554
  %v644 = vsel %vm80, %v491, %v539
  %v645 = vsel %vm81, %v475, %v555
  %v646 = vsel %vm80, %v492, %v540
  %v647 = vsel %vm81, %v476, %v556
  %v648 = vsel %vm80, %v493, %v541
  %v649 = vsel %vm81, %v477, %v557
  %v650 = vsel %vm80, %v494, %v542
  %v651 = vsel %vm81, %v478, %v558
  %v652 = vsel %vm80, %v495, %v543
  %v653 = vsel %vm81, %v479, %v559
  %v654 = vsel %vm80, %v496, %v544
  %v655 = vsel %vm81, %v480, %v560
  %v656 = vsel %vm80, %v497, %v545
  %v657 = vsel %vm81, %v481, %v561
  %v658 = vadd.f32 %v594, %v626
  %v659 = vadd.f32 %v595, %v627
  %v660 = vadd.f32 %v596, %v628
  %v661 = vadd.f32 %v597, %v629
  %v662 = vadd.f32 %v598, %v630
  %v663 = vadd.f32 %v599, %v631
  %v664 = vadd.f32 %v600, %v632
  %v665 = vadd.f32 %v601, %v633
  %v666 = vadd.f32 %v602, %v634
  %v667 = vadd.f32 %v603, %v635
  %v668 = vadd.f32 %v604, %v636
  %v669 = vadd.f32 %v605, %v637
  %v670 = vadd.f32 %v606, %v638
  %v671 = vadd.f32 %v607, %v639
  %v672 = vadd.f32 %v608, %v640
  %v673 = vadd.f32 %v609, %v641
  %v674 = vadd.f32 %v610, %v642
  %v675 = vadd.f32 %v611, %v643
  %v676 = vadd.f32 %v612, %v644
  %v677 = vadd.f32 %v613, %v645
  %v678 = vadd.f32 %v614, %v646
  %v679 = vadd.f32 %v615, %v647
  %v680 = vadd.f32 %v616, %v648
  %v681 = vadd.f32 %v617, %v649
  %v682 = vadd.f32 %v618, %v650
  %v683 = vadd.f32 %v619, %v651
  %v684 = vadd.f32 %v620, %v652
  %v685 = vadd.f32 %v621, %v653
  %v686 = vadd.f32 %v622, %v654
  %v687 = vadd.f32 %v623, %v655
  %v688 = vadd.f32 %v624, %v656
  %v689 = vadd.f32 %v625, %v657
  %v690 = vadd.f32 %v660, %v658
  %v691 = vadd.f32 %v661, %v659
  %v692 = vadd.f32 %v660, %v662
  %v693 = vadd.f32 %v661, %v663
  %v694 = vadd.f32 %v662, %v664
  %v695 = vadd.f32 %v663, %v665
  %v696 = vadd.f32 %v664, %v666
  %v697 = vadd.f32 %v665, %v667
  %v698 = vadd.f32 %v666, %v668
  %v699 = vadd.f32 %v667, %v669
  %v700 = vadd.f32 %v668, %v670
  %v701 = vadd.f32 %v669, %v671
  %v702 = vadd.f32 %v670, %v672
  %v703 = vadd.f32 %v671, %v673
  %v704 = vadd.f32 %v672, %v674
  %v705 = vadd.f32 %v673, %v675
  %v706 = vadd.f32 %v674, %v676
  %v707 = vadd.f32 %v675, %v677
  %v708 = vadd.f32 %v676, %v678
  %v709 = vadd.f32 %v677, %v679
  %v710 = vadd.f32 %v678, %v680
  %v711 = vadd.f32 %v679, %v681
  %v712 = vadd.f32 %v680, %v682
  %v713 = vadd.f32 %v681, %v683
  %v714 = vadd.f32 %v682, %v684
  %v715 = vadd.f32 %v683, %v685
  %v716 = vadd.f32 %v684, %v686
  %v717 = vadd.f32 %v685, %v687
  %v718 = vadd.f32 %v686, %v688
  %v719 = vadd.f32 %v687, %v689
  %v720 = vadd.f32 %v690, %v660
  %v721 = vadd.f32 %v691, %v661
  %v722 = vadd.f32 %v690, %v662
  %v723 = vadd.f32 %v691, %v663
  %v724 = vadd.f32 %v692, %v664
  %v725 = vadd.f32 %v693, %v665
  %v726 = vadd.f32 %v694, %v666
  %v727 = vadd.f32 %v695, %v667
  %v728 = vadd.f32 %v696, %v668
  %v729 = vadd.f32 %v697, %v669
  %v730 = vadd.f32 %v698, %v670
  %v731 = vadd.f32 %v699, %v671
  %v732 = vadd.f32 %v700, %v672
  %v733 = vadd.f32 %v701, %v673
  %v734 = vadd.f32 %v702, %v674
  %v735 = vadd.f32 %v703, %v675
  %v736 = vadd.f32 %v704, %v676
  %v737 = vadd.f32 %v705, %v677
  %v738 = vadd.f32 %v706, %v678
  %v739 = vadd.f32 %v707, %v679
  %v740 = vadd.f32 %v708, %v680
  %v741 = vadd.f32 %v709, %v681
  %v742 = vadd.f32 %v710, %v682
  %v743 = vadd.f32 %v711, %v683
  %v744 = vadd.f32 %v712, %v684
  %v745 = vadd.f32 %v713, %v685
  %v746 = vadd.f32 %v714, %v686
  %v747 = vadd.f32 %v715, %v687
  %v748 = vadd.f32 %v716, %v688
  %v749 = vadd.f32 %v717, %v689
  %v750 = vadd.f32 %v718, %v686
  %v751 = vadd.f32 %v719, %v687
  %v752 = vmul.f32 %v720, 0.11111111
  %v753 = vmul.f32 %v721, 0.11111111
  %v754 = vmul.f32 %v722, 0.11111111
  %v755 = vmul.f32 %v723, 0.11111111
  %v756 = vmul.f32 %v724, 0.11111111
  %v757 = vmul.f32 %v725, 0.11111111
  %v758 = vmul.f32 %v726, 0.11111111
  %v759 = vmul.f32 %v727, 0.11111111
  %v760 = vmul.f32 %v728, 0.11111111
  %v761 = vmul.f32 %v729, 0.11111111
  %v762 = vmul.f32 %v730, 0.11111111
  %v763 = vmul.f32 %v731, 0.11111111
  %v764 = vmul.f32 %v732, 0.11111111
  %v765 = vmul.f32 %v733, 0.11111111
  %v766 = vmul.f32 %v734, 0.11111111
  %v767 = vmul.f32 %v735, 0.11111111
  %v768 = vmul.f32 %v736, 0.11111111
  %v769 = vmul.f32 %v737, 0.11111111
  %v770 = vmul.f32 %v738, 0.11111111
  %v771 = vmul.f32 %v739, 0.11111111
  %v772 = vmul.f32 %v740, 0.11111111
  %v773 = vmul.f32 %v741, 0.11111111
  %v774 = vmul.f32 %v742, 0.11111111
  %v775 = vmul.f32 %v743, 0.11111111
  %v776 = vmul.f32 %v744, 0.11111111
  %v777 = vmul.f32 %v745, 0.11111111
  %v778 = vmul.f32 %v746, 0.11111111
  %v779 = vmul.f32 %v747, 0.11111111
  %v780 = vmul.f32 %v748, 0.11111111
  %v781 = vmul.f32 %v749, 0.11111111
  %v782 = vmul.f32 %v750, 0.11111111
  %v783 = vmul.f32 %v751, 0.11111111
  %v784 = vmul.f32 %v11, %v11
  %v785 = vmul.f32 %v12, %v12
  %v786 = vmul.f32 %v13, %v13
  %v787 = vmul.f32 %v14, %v14
  %v788 = vmul.f32 %v15, %v15
  %v789 = vmul.f32 %v16, %v16
  %v790 = vmul.f32 %v17, %v17
  %v791 = vmul.f32 %v18, %v18
  %v792 = vmul.f32 %v19, %v19
  %v793 = vmul.f32 %v20, %v20
  %v794 = vmul.f32 %v21, %v21
  %v795 = vmul.f32 %v22, %v22
  %v796 = vmul.f32 %v23, %v23
  %v797 = vmul.f32 %v24, %v24
  %v798 = vmul.f32 %v25, %v25
  %v799 = vmul.f32 %v26, %v26
  %v800 = vmul.f32 %v27, %v27
  %v801 = vmul.f32 %v28, %v28
  %v802 = vmul.f32 %v29, %v29
  %v803 = vmul.f32 %v30, %v30
  %v804 = vmul.f32 %v31, %v31
  %v805 = vmul.f32 %v32, %v32
  %v806 = vmul.f32 %v33, %v33
  %v807 = vmul.f32 %v34, %v34
  %v808 = vmul.f32 %v35, %v35
  %v809 = vmul.f32 %v36, %v36
  %v810 = vmul.f32 %v37, %v37
  %v811 = vmul.f32 %v38, %v38
  %v812 = vmul.f32 %v39, %v39
  %v813 = vmul.f32 %v40, %v40
  %v814 = vmul.f32 %v41, %v41
  %v815 = vmul.f32 %v42, %v42
  %v816 = vrot.slane %v784, 7
  %v817 = vrot.slane %v786, 7
  %v818 = vrot.slane %v788, 7
  %v819 = vrot.slane %v790, 7
  %v820 = vrot.slane %v792, 7
  %v821 = vrot.slane %v794, 7
  %v822 = vrot.slane %v796, 7
  %v823 = vrot.slane %v798, 7
  %v824 = vrot.slane %v800, 7
  %v825 = vrot.slane %v802, 7
  %v826 = vrot.slane %v804, 7
  %v827 = vrot.slane %v806, 7
  %v828 = vrot.slane %v808, 7
  %v829 = vrot.slane %v810, 7
  %v830 = vrot.slane %v812, 7
  %v831 = vrot.slane %v814, 7
  %v832 = vrot.slane %v785, 7
  %v833 = vrot.slane %v787, 7
  %v834 = vrot.slane %v789, 7
  %v835 = vrot.slane %v791, 7
  %v836 = vrot.slane %v793, 7
  %v837 = vrot.slane %v795, 7
  %v838 = vrot.slane %v797, 7
  %v839 = vrot.slane %v799, 7
  %v840 = vrot.slane %v801, 7
  %v841 = vrot.slane %v803, 7
  %v842 = vrot.slane %v805, 7
  %v843 = vrot.slane %v807, 7
  %v844 = vrot.slane %v809, 7
  %v845 = vrot.slane %v811, 7
  %v846 = vrot.slane %v813, 7
  %v847 = vrot.slane %v815, 7
  %v848 = vsel %vm114, %v816, %v832
  %v849 = vsel %vm114, %v817, %v833
  %v850 = vsel %vm114, %v818, %v834
  %v851 = vsel %vm114, %v819, %v835
  %v852 = vsel %vm114, %v820, %v836
  %v853 = vsel %vm114, %v821, %v837
  %v854 = vsel %vm114, %v822, %v838
  %v855 = vsel %vm114, %v823, %v839
  %v856 = vsel %vm114, %v824, %v840
  %v857 = vsel %vm114, %v825, %v841
  %v858 = vsel %vm114, %v826, %v842
  %v859 = vsel %vm114, %v827, %v843
  %v860 = vsel %vm114, %v828, %v844
  %v861 = vsel %vm114, %v829, %v845
  %v862 = vsel %vm114, %v830, %v846
  %v863 = vsel %vm114, %v831, %v847
  %v864 = vsel %vm114, %v832, %v816
  %v865 = vsel %vm114, %v833, %v817
  %v866 = vsel %vm114, %v834, %v818
  %v867 = vsel %vm114, %v835, %v819
  %v868 = vsel %vm114, %v836, %v820
  %v869 = vsel %vm114, %v837, %v821
  %v870 = vsel %vm114, %v838, %v822
  %v871 = vsel %vm114, %v839, %v823
  %v872 = vsel %vm114, %v840, %v824
  %v873 = vsel %vm114, %v841, %v825
  %v874 = vsel %vm114, %v842, %v826
  %v875 = vsel %vm114, %v843, %v827
  %v876 = vsel %vm114, %v844, %v828
  %v877 = vsel %vm114, %v845, %v829
  %v878 = vsel %vm114, %v846, %v830
  %v879 = vsel %vm114, %v847, %v831
  %v880 = vrot.slane %v784, 1
  %v881 = vrot.slane %v786, 1
  %v882 = vrot.slane %v788, 1
  %v883 = vrot.slane %v790, 1
  %v884 = vrot.slane %v792, 1
  %v885 = vrot.slane %v794, 1
  %v886 = vrot.slane %v796, 1
  %v887 = vrot.slane %v798, 1
  %v888 = vrot.slane %v800, 1
  %v889 = vrot.slane %v802, 1
  %v890 = vrot.slane %v804, 1
  %v891 = vrot.slane %v806, 1
  %v892 = vrot.slane %v808, 1
  %v893 = vrot.slane %v810, 1
  %v894 = vrot.slane %v812, 1
  %v895 = vrot.slane %v814, 1
  %v896 = vrot.slane %v785, 1
  %v897 = vrot.slane %v787, 1
  %v898 = vrot.slane %v789, 1
  %v899 = vrot.slane %v791, 1
  %v900 = vrot.slane %v793, 1
  %v901 = vrot.slane %v795, 1
  %v902 = vrot.slane %v797, 1
  %v903 = vrot.slane %v799, 1
  %v904 = vrot.slane %v801, 1
  %v905 = vrot.slane %v803, 1
  %v906 = vrot.slane %v805, 1
  %v907 = vrot.slane %v807, 1
  %v908 = vrot.slane %v809, 1
  %v909 = vrot.slane %v811, 1
  %v910 = vrot.slane %v813, 1
  %v911 = vrot.slane %v815, 1
  %v912 = vsel %vm179, %v880, %v896
  %v913 = vsel %vm179, %v881, %v897
  %v914 = vsel %vm179, %v882, %v898
  %v915 = vsel %vm179, %v883, %v899
  %v916 = vsel %vm179, %v884, %v900
  %v917 = vsel %vm179, %v885, %v901
  %v918 = vsel %vm179, %v886, %v902
  %v919 = vsel %vm179, %v887, %v903
  %v920 = vsel %vm179, %v888, %v904
  %v921 = vsel %vm179, %v889, %v905
  %v922 = vsel %vm179, %v890, %v906
  %v923 = vsel %vm179, %v891, %v907
  %v924 = vsel %vm179, %v892, %v908
  %v925 = vsel %vm179, %v893, %v909
  %v926 = vsel %vm179, %v894, %v910
  %v927 = vsel %vm179, %v895, %v911
  %v928 = vsel %vm179, %v896, %v880
  %v929 = vsel %vm179, %v897, %v881
  %v930 = vsel %vm179, %v898, %v882
  %v931 = vsel %vm179, %v899, %v883
  %v932 = vsel %vm179, %v900, %v884
  %v933 = vsel %vm179, %v901, %v885
  %v934 = vsel %vm179, %v902, %v886
  %v935 = vsel %vm179, %v903, %v887
  %v936 = vsel %vm179, %v904, %v888
  %v937 = vsel %vm179, %v905, %v889
  %v938 = vsel %vm179, %v906, %v890
  %v939 = vsel %vm179, %v907, %v891
  %v940 = vsel %vm179, %v908, %v892
  %v941 = vsel %vm179, %v909, %v893
  %v942 = vsel %vm179, %v910, %v894
  %v943 = vsel %vm179, %v911, %v895
  %v944 = vsel %vm78, %v912, %v864
  %v945 = vsel %vm79, %v928, %v848
  %v946 = vsel %vm78, %v913, %v865
  %v947 = vsel %vm79, %v929, %v849
  %v948 = vsel %vm78, %v914, %v866
  %v949 = vsel %vm79, %v930, %v850
  %v950 = vsel %vm78, %v915, %v867
  %v951 = vsel %vm79, %v931, %v851
  %v952 = vsel %vm78, %v916, %v868
  %v953 = vsel %vm79, %v932, %v852
  %v954 = vsel %vm78, %v917, %v869
  %v955 = vsel %vm79, %v933, %v853
  %v956 = vsel %vm78, %v918, %v870
  %v957 = vsel %vm79, %v934, %v854
  %v958 = vsel %vm78, %v919, %v871
  %v959 = vsel %vm79, %v935, %v855
  %v960 = vsel %vm78, %v920, %v872
  %v961 = vsel %vm79, %v936, %v856
  %v962 = vsel %vm78, %v921, %v873
  %v963 = vsel %vm79, %v937, %v857
  %v964 = vsel %vm78, %v922, %v874
  %v965 = vsel %vm79, %v938, %v858
  %v966 = vsel %vm78, %v923, %v875
  %v967 = vsel %vm79, %v939, %v859
  %v968 = vsel %vm78, %v924, %v876
  %v969 = vsel %vm79, %v940, %v860
  %v970 = vsel %vm78, %v925, %v877
  %v971 = vsel %vm79, %v941, %v861
  %v972 = vsel %vm78, %v926, %v878
  %v973 = vsel %vm79, %v942, %v862
  %v974 = vsel %vm78, %v927, %v879
  %v975 = vsel %vm79, %v943, %v863
  %v976 = vadd.f32 %v784, %v944
  %v977 = vadd.f32 %v785, %v945
  %v978 = vadd.f32 %v786, %v946
  %v979 = vadd.f32 %v787, %v947
  %v980 = vadd.f32 %v788, %v948
  %v981 = vadd.f32 %v789, %v949
  %v982 = vadd.f32 %v790, %v950
  %v983 = vadd.f32 %v791, %v951
  %v984 = vadd.f32 %v792, %v952
  %v985 = vadd.f32 %v793, %v953
  %v986 = vadd.f32 %v794, %v954
  %v987 = vadd.f32 %v795, %v955
  %v988 = vadd.f32 %v796, %v956
  %v989 = vadd.f32 %v797, %v957
  %v990 = vadd.f32 %v798, %v958
  %v991 = vadd.f32 %v799, %v959
  %v992 = vadd.f32 %v800, %v960
  %v993 = vadd.f32 %v801, %v961
  %v994 = vadd.f32 %v802, %v962
  %v995 = vadd.f32 %v803, %v963
  %v996 = vadd.f32 %v804, %v964
  %v997 = vadd.f32 %v805, %v965
  %v998 = vadd.f32 %v806, %v966
  %v999 = vadd.f32 %v807, %v967
  %v1000 = vadd.f32 %v808, %v968
  %v1001 = vadd.f32 %v809, %v969
  %v1002 = vadd.f32 %v810, %v970
  %v1003 = vadd.f32 %v811, %v971
  %v1004 = vadd.f32 %v812, %v972
  %v1005 = vadd.f32 %v813, %v973
  %v1006 = vadd.f32 %v814, %v974
  %v1007 = vadd.f32 %v815, %v975
  %v1008 = vsel %vm80, %v864, %v912
  %v1009 = vsel %vm81, %v848, %v928
  %v1010 = vsel %vm80, %v865, %v913
  %v1011 = vsel %vm81, %v849, %v929
  %v1012 = vsel %vm80, %v866, %v914
  %v1013 = vsel %vm81, %v850, %v930
  %v1014 = vsel %vm80, %v867, %v915
  %v1015 = vsel %vm81, %v851, %v931
  %v1016 = vsel %vm80, %v868, %v916
  %v1017 = vsel %vm81, %v852, %v932
  %v1018 = vsel %vm80, %v869, %v917
  %v1019 = vsel %vm81, %v853, %v933
  %v1020 = vsel %vm80, %v870, %v918
  %v1021 = vsel %vm81, %v854, %v934
  %v1022 = vsel %vm80, %v871, %v919
  %v1023 = vsel %vm81, %v855, %v935
  %v1024 = vsel %vm80, %v872, %v920
  %v1025 = vsel %vm81, %v856, %v936
  %v1026 = vsel %vm80, %v873, %v921
  %v1027 = vsel %vm81, %v857, %v937
  %v1028 = vsel %vm80, %v874, %v922
  %v1029 = vsel %vm81, %v858, %v938
  %v1030 = vsel %vm80, %v875, %v923
  %v1031 = vsel %vm81, %v859, %v939
  %v1032 = vsel %vm80, %v876, %v924
  %v1033 = vsel %vm81, %v860, %v940
  %v1034 = vsel %vm80, %v877, %v925
  %v1035 = vsel %vm81, %v861, %v941
  %v1036 = vsel %vm80, %v878, %v926
  %v1037 = vsel %vm81, %v862, %v942
  %v1038 = vsel %vm80, %v879, %v927
  %v1039 = vsel %vm81, %v863, %v943
  %v1040 = vadd.f32 %v976, %v1008
  %v1041 = vadd.f32 %v977, %v1009
  %v1042 = vadd.f32 %v978, %v1010
  %v1043 = vadd.f32 %v979, %v1011
  %v1044 = vadd.f32 %v980, %v1012
  %v1045 = vadd.f32 %v981, %v1013
  %v1046 = vadd.f32 %v982, %v1014
  %v1047 = vadd.f32 %v983, %v1015
  %v1048 = vadd.f32 %v984, %v1016
  %v1049 = vadd.f32 %v985, %v1017
  %v1050 = vadd.f32 %v986, %v1018
  %v1051 = vadd.f32 %v987, %v1019
  %v1052 = vadd.f32 %v988, %v1020
  %v1053 = vadd.f32 %v989, %v1021
  %v1054 = vadd.f32 %v990, %v1022
  %v1055 = vadd.f32 %v991, %v1023
  %v1056 = vadd.f32 %v992, %v1024
  %v1057 = vadd.f32 %v993, %v1025
  %v1058 = vadd.f32 %v994, %v1026
  %v1059 = vadd.f32 %v995, %v1027
  %v1060 = vadd.f32 %v996, %v1028
  %v1061 = vadd.f32 %v997, %v1029
  %v1062 = vadd.f32 %v998, %v1030
  %v1063 = vadd.f32 %v999, %v1031
  %v1064 = vadd.f32 %v1000, %v1032
  %v1065 = vadd.f32 %v1001, %v1033
  %v1066 = vadd.f32 %v1002, %v1034
  %v1067 = vadd.f32 %v1003, %v1035
  %v1068 = vadd.f32 %v1004, %v1036
  %v1069 = vadd.f32 %v1005, %v1037
  %v1070 = vadd.f32 %v1006, %v1038
  %v1071 = vadd.f32 %v1007, %v1039
  %v1072 = vadd.f32 %v1042, %v1040
  %v1073 = vadd.f32 %v1043, %v1041
  %v1074 = vadd.f32 %v1042, %v1044
  %v1075 = vadd.f32 %v1043, %v1045
  %v1076 = vadd.f32 %v1044, %v1046
  %v1077 = vadd.f32 %v1045, %v1047
  %v1078 = vadd.f32 %v1046, %v1048
  %v1079 = vadd.f32 %v1047, %v1049
  %v1080 = vadd.f32 %v1048, %v1050
  %v1081 = vadd.f32 %v1049, %v1051
  %v1082 = vadd.f32 %v1050, %v1052
  %v1083 = vadd.f32 %v1051, %v1053
  %v1084 = vadd.f32 %v1052, %v1054
  %v1085 = vadd.f32 %v1053, %v1055
  %v1086 = vadd.f32 %v1054, %v1056
  %v1087 = vadd.f32 %v1055, %v1057
  %v1088 = vadd.f32 %v1056, %v1058
  %v1089 = vadd.f32 %v1057, %v1059
  %v1090 = vadd.f32 %v1058, %v1060
  %v1091 = vadd.f32 %v1059, %v1061
  %v1092 = vadd.f32 %v1060, %v1062
  %v1093 = vadd.f32 %v1061, %v1063
  %v1094 = vadd.f32 %v1062, %v1064
  %v1095 = vadd.f32 %v1063, %v1065
  %v1096 = vadd.f32 %v1064, %v1066
  %v1097 = vadd.f32 %v1065, %v1067
  %v1098 = vadd.f32 %v1066, %v1068
  %v1099 = vadd.f32 %v1067, %v1069
  %v1100 = vadd.f32 %v1068, %v1070
  %v1101 = vadd.f32 %v1069, %v1071
  %v1102 = vadd.f32 %v1072, %v1042
  %v1103 = vadd.f32 %v1073, %v1043
  %v1104 = vadd.f32 %v1072, %v1044
  %v1105 = vadd.f32 %v1073, %v1045
  %v1106 = vadd.f32 %v1074, %v1046
  %v1107 = vadd.f32 %v1075, %v1047
  %v1108 = vadd.f32 %v1076, %v1048
  %v1109 = vadd.f32 %v1077, %v1049
  %v1110 = vadd.f32 %v1078, %v1050
  %v1111 = vadd.f32 %v1079, %v1051
  %v1112 = vadd.f32 %v1080, %v1052
  %v1113 = vadd.f32 %v1081, %v1053
  %v1114 = vadd.f32 %v1082, %v1054
  %v1115 = vadd.f32 %v1083, %v1055
  %v1116 = vadd.f32 %v1084, %v1056
  %v1117 = vadd.f32 %v1085, %v1057
  %v1118 = vadd.f32 %v1086, %v1058
  %v1119 = vadd.f32 %v1087, %v1059
  %v1120 = vadd.f32 %v1088, %v1060
  %v1121 = vadd.f32 %v1089, %v1061
  %v1122 = vadd.f32 %v1090, %v1062
  %v1123 = vadd.f32 %v1091, %v1063
  %v1124 = vadd.f32 %v1092, %v1064
  %v1125 = vadd.f32 %v1093, %v1065
  %v1126 = vadd.f32 %v1094, %v1066
  %v1127 = vadd.f32 %v1095, %v1067
  %v1128 = vadd.f32 %v1096, %v1068
  %v1129 = vadd.f32 %v1097, %v1069
  %v1130 = vadd.f32 %v1098, %v1070
  %v1131 = vadd.f32 %v1099, %v1071
  %v1132 = vadd.f32 %v1100, %v1068
  %v1133 = vadd.f32 %v1101, %v1069
  %v1134 = vmul.f32 %v1102, 0.11111111
  %v1135 = vmul.f32 %v1103, 0.11111111
  %v1136 = vmul.f32 %v1104, 0.11111111
  %v1137 = vmul.f32 %v1105, 0.11111111
  %v1138 = vmul.f32 %v1106, 0.11111111
  %v1139 = vmul.f32 %v1107, 0.11111111
  %v1140 = vmul.f32 %v1108, 0.11111111
  %v1141 = vmul.f32 %v1109, 0.11111111
  %v1142 = vmul.f32 %v1110, 0.11111111
  %v1143 = vmul.f32 %v1111, 0.11111111
  %v1144 = vmul.f32 %v1112, 0.11111111
  %v1145 = vmul.f32 %v1113, 0.11111111
  %v1146 = vmul.f32 %v1114, 0.11111111
  %v1147 = vmul.f32 %v1115, 0.11111111
  %v1148 = vmul.f32 %v1116, 0.11111111
  %v1149 = vmul.f32 %v1117, 0.11111111
  %v1150 = vmul.f32 %v1118, 0.11111111
  %v1151 = vmul.f32 %v1119, 0.11111111
  %v1152 = vmul.f32 %v1120, 0.11111111
  %v1153 = vmul.f32 %v1121, 0.11111111
  %v1154 = vmul.f32 %v1122, 0.11111111
  %v1155 = vmul.f32 %v1123, 0.11111111
  %v1156 = vmul.f32 %v1124, 0.11111111
  %v1157 = vmul.f32 %v1125, 0.11111111
  %v1158 = vmul.f32 %v1126, 0.11111111
  %v1159 = vmul.f32 %v1127, 0.11111111
  %v1160 = vmul.f32 %v1128, 0.11111111
  %v1161 = vmul.f32 %v1129, 0.11111111
  %v1162 = vmul.f32 %v1130, 0.11111111
  %v1163 = vmul.f32 %v1131, 0.11111111
  %v1164 = vmul.f32 %v1132, 0.11111111
  %v1165 = vmul.f32 %v1133, 0.11111111
  %v1166 = vmul.f32 %v402, %v402
  %v1167 = vmul.f32 %v403, %v403
  %v1168 = vmul.f32 %v404, %v404
  %v1169 = vmul.f32 %v405, %v405
  %v1170 = vmul.f32 %v406, %v406
  %v1171 = vmul.f32 %v407, %v407
  %v1172 = vmul.f32 %v408, %v408
  %v1173 = vmul.f32 %v409, %v409
  %v1174 = vmul.f32 %v410, %v410
  %v1175 = vmul.f32 %v411, %v411
  %v1176 = vmul.f32 %v412, %v412
  %v1177 = vmul.f32 %v413, %v413
  %v1178 = vmul.f32 %v414, %v414
  %v1179 = vmul.f32 %v415, %v415
  %v1180 = vmul.f32 %v416, %v416
  %v1181 = vmul.f32 %v417, %v417
  %v1182 = vmul.f32 %v418, %v418
  %v1183 = vmul.f32 %v419, %v419
  %v1184 = vmul.f32 %v420, %v420
  %v1185 = vmul.f32 %v421, %v421
  %v1186 = vmul.f32 %v422, %v422
  %v1187 = vmul.f32 %v423, %v423
  %v1188 = vmul.f32 %v424, %v424
  %v1189 = vmul.f32 %v425, %v425
  %v1190 = vmul.f32 %v426, %v426
  %v1191 = vmul.f32 %v427, %v427
  %v1192 = vmul.f32 %v428, %v428
  %v1193 = vmul.f32 %v429, %v429
  %v1194 = vmul.f32 %v430, %v430
  %v1195 = vmul.f32 %v431, %v431
  %v1196 = vmul.f32 %v432, %v432
  %v1197 = vmul.f32 %v433, %v433
  %v1198 = vsub.f32 %v1134, %v1166
  %v1199 = vsub.f32 %v1135, %v1167
  %v1200 = vsub.f32 %v1136, %v1168
  %v1201 = vsub.f32 %v1137, %v1169
  %v1202 = vsub.f32 %v1138, %v1170
  %v1203 = vsub.f32 %v1139, %v1171
  %v1204 = vsub.f32 %v1140, %v1172
  %v1205 = vsub.f32 %v1141, %v1173
  %v1206 = vsub.f32 %v1142, %v1174
  %v1207 = vsub.f32 %v1143, %v1175
  %v1208 = vsub.f32 %v1144, %v1176
  %v1209 = vsub.f32 %v1145, %v1177
  %v1210 = vsub.f32 %v1146, %v1178
  %v1211 = vsub.f32 %v1147, %v1179
  %v1212 = vsub.f32 %v1148, %v1180
  %v1213 = vsub.f32 %v1149, %v1181
  %v1214 = vsub.f32 %v1150, %v1182
  %v1215 = vsub.f32 %v1151, %v1183
  %v1216 = vsub.f32 %v1152, %v1184
  %v1217 = vsub.f32 %v1153, %v1185
  %v1218 = vsub.f32 %v1154, %v1186
  %v1219 = vsub.f32 %v1155, %v1187
  %v1220 = vsub.f32 %v1156, %v1188
  %v1221 = vsub.f32 %v1157, %v1189
  %v1222 = vsub.f32 %v1158, %v1190
  %v1223 = vsub.f32 %v1159, %v1191
  %v1224 = vsub.f32 %v1160, %v1192
  %v1225 = vsub.f32 %v1161, %v1193
  %v1226 = vsub.f32 %v1162, %v1194
  %v1227 = vsub.f32 %v1163, %v1195
  %v1228 = vsub.f32 %v1164, %v1196
  %v1229 = vsub.f32 %v1165, %v1197
  %v1230 = vmul.f32 %v43, %v43
  %v1231 = vmul.f32 %v44, %v44
  %v1232 = vmul.f32 %v45, %v45
  %v1233 = vmul.f32 %v46, %v46
  %v1234 = vmul.f32 %v47, %v47
  %v1235 = vmul.f32 %v48, %v48
  %v1236 = vmul.f32 %v49, %v49
  %v1237 = vmul.f32 %v50, %v50
  %v1238 = vmul.f32 %v51, %v51
  %v1239 = vmul.f32 %v52, %v52
  %v1240 = vmul.f32 %v53, %v53
  %v1241 = vmul.f32 %v54, %v54
  %v1242 = vmul.f32 %v55, %v55
  %v1243 = vmul.f32 %v56, %v56
  %v1244 = vmul.f32 %v57, %v57
  %v1245 = vmul.f32 %v58, %v58
  %v1246 = vmul.f32 %v59, %v59
  %v1247 = vmul.f32 %v60, %v60
  %v1248 = vmul.f32 %v61, %v61
  %v1249 = vmul.f32 %v62, %v62
  %v1250 = vmul.f32 %v63, %v63
  %v1251 = vmul.f32 %v64, %v64
  %v1252 = vmul.f32 %v65, %v65
  %v1253 = vmul.f32 %v66, %v66
  %v1254 = vmul.f32 %v67, %v67
  %v1255 = vmul.f32 %v68, %v68
  %v1256 = vmul.f32 %v69, %v69
  %v1257 = vmul.f32 %v70, %v70
  %v1258 = vmul.f32 %v71, %v71
  %v1259 = vmul.f32 %v72, %v72
  %v1260 = vmul.f32 %v73, %v73
  %v1261 = vmul.f32 %v74, %v74
  %v1262 = vrot.slane %v1230, 7
  %v1263 = vrot.slane %v1232, 7
  %v1264 = vrot.slane %v1234, 7
  %v1265 = vrot.slane %v1236, 7
  %v1266 = vrot.slane %v1238, 7
  %v1267 = vrot.slane %v1240, 7
  %v1268 = vrot.slane %v1242, 7
  %v1269 = vrot.slane %v1244, 7
  %v1270 = vrot.slane %v1246, 7
  %v1271 = vrot.slane %v1248, 7
  %v1272 = vrot.slane %v1250, 7
  %v1273 = vrot.slane %v1252, 7
  %v1274 = vrot.slane %v1254, 7
  %v1275 = vrot.slane %v1256, 7
  %v1276 = vrot.slane %v1258, 7
  %v1277 = vrot.slane %v1260, 7
  %v1278 = vrot.slane %v1231, 7
  %v1279 = vrot.slane %v1233, 7
  %v1280 = vrot.slane %v1235, 7
  %v1281 = vrot.slane %v1237, 7
  %v1282 = vrot.slane %v1239, 7
  %v1283 = vrot.slane %v1241, 7
  %v1284 = vrot.slane %v1243, 7
  %v1285 = vrot.slane %v1245, 7
  %v1286 = vrot.slane %v1247, 7
  %v1287 = vrot.slane %v1249, 7
  %v1288 = vrot.slane %v1251, 7
  %v1289 = vrot.slane %v1253, 7
  %v1290 = vrot.slane %v1255, 7
  %v1291 = vrot.slane %v1257, 7
  %v1292 = vrot.slane %v1259, 7
  %v1293 = vrot.slane %v1261, 7
  %v1294 = vsel %vm114, %v1262, %v1278
  %v1295 = vsel %vm114, %v1263, %v1279
  %v1296 = vsel %vm114, %v1264, %v1280
  %v1297 = vsel %vm114, %v1265, %v1281
  %v1298 = vsel %vm114, %v1266, %v1282
  %v1299 = vsel %vm114, %v1267, %v1283
  %v1300 = vsel %vm114, %v1268, %v1284
  %v1301 = vsel %vm114, %v1269, %v1285
  %v1302 = vsel %vm114, %v1270, %v1286
  %v1303 = vsel %vm114, %v1271, %v1287
  %v1304 = vsel %vm114, %v1272, %v1288
  %v1305 = vsel %vm114, %v1273, %v1289
  %v1306 = vsel %vm114, %v1274, %v1290
  %v1307 = vsel %vm114, %v1275, %v1291
  %v1308 = vsel %vm114, %v1276, %v1292
  %v1309 = vsel %vm114, %v1277, %v1293
  %v1310 = vsel %vm114, %v1278, %v1262
  %v1311 = vsel %vm114, %v1279, %v1263
  %v1312 = vsel %vm114, %v1280, %v1264
  %v1313 = vsel %vm114, %v1281, %v1265
  %v1314 = vsel %vm114, %v1282, %v1266
  %v1315 = vsel %vm114, %v1283, %v1267
  %v1316 = vsel %vm114, %v1284, %v1268
  %v1317 = vsel %vm114, %v1285, %v1269
  %v1318 = vsel %vm114, %v1286, %v1270
  %v1319 = vsel %vm114, %v1287, %v1271
  %v1320 = vsel %vm114, %v1288, %v1272
  %v1321 = vsel %vm114, %v1289, %v1273
  %v1322 = vsel %vm114, %v1290, %v1274
  %v1323 = vsel %vm114, %v1291, %v1275
  %v1324 = vsel %vm114, %v1292, %v1276
  %v1325 = vsel %vm114, %v1293, %v1277
  %v1326 = vrot.slane %v1230, 1
  %v1327 = vrot.slane %v1232, 1
  %v1328 = vrot.slane %v1234, 1
  %v1329 = vrot.slane %v1236, 1
  %v1330 = vrot.slane %v1238, 1
  %v1331 = vrot.slane %v1240, 1
  %v1332 = vrot.slane %v1242, 1
  %v1333 = vrot.slane %v1244, 1
  %v1334 = vrot.slane %v1246, 1
  %v1335 = vrot.slane %v1248, 1
  %v1336 = vrot.slane %v1250, 1
  %v1337 = vrot.slane %v1252, 1
  %v1338 = vrot.slane %v1254, 1
  %v1339 = vrot.slane %v1256, 1
  %v1340 = vrot.slane %v1258, 1
  %v1341 = vrot.slane %v1260, 1
  %v1342 = vrot.slane %v1231, 1
  %v1343 = vrot.slane %v1233, 1
  %v1344 = vrot.slane %v1235, 1
  %v1345 = vrot.slane %v1237, 1
  %v1346 = vrot.slane %v1239, 1
  %v1347 = vrot.slane %v1241, 1
  %v1348 = vrot.slane %v1243, 1
  %v1349 = vrot.slane %v1245, 1
  %v1350 = vrot.slane %v1247, 1
  %v1351 = vrot.slane %v1249, 1
  %v1352 = vrot.slane %v1251, 1
  %v1353 = vrot.slane %v1253, 1
  %v1354 = vrot.slane %v1255, 1
  %v1355 = vrot.slane %v1257, 1
  %v1356 = vrot.slane %v1259, 1
  %v1357 = vrot.slane %v1261, 1
  %v1358 = vsel %vm179, %v1326, %v1342
  %v1359 = vsel %vm179, %v1327, %v1343
  %v1360 = vsel %vm179, %v1328, %v1344
  %v1361 = vsel %vm179, %v1329, %v1345
  %v1362 = vsel %vm179, %v1330, %v1346
  %v1363 = vsel %vm179, %v1331, %v1347
  %v1364 = vsel %vm179, %v1332, %v1348
  %v1365 = vsel %vm179, %v1333, %v1349
  %v1366 = vsel %vm179, %v1334, %v1350
  %v1367 = vsel %vm179, %v1335, %v1351
  %v1368 = vsel %vm179, %v1336, %v1352
  %v1369 = vsel %vm179, %v1337, %v1353
  %v1370 = vsel %vm179, %v1338, %v1354
  %v1371 = vsel %vm179, %v1339, %v1355
  %v1372 = vsel %vm179, %v1340, %v1356
  %v1373 = vsel %vm179, %v1341, %v1357
  %v1374 = vsel %vm179, %v1342, %v1326
  %v1375 = vsel %vm179, %v1343, %v1327
  %v1376 = vsel %vm179, %v1344, %v1328
  %v1377 = vsel %vm179, %v1345, %v1329
  %v1378 = vsel %vm179, %v1346, %v1330
  %v1379 = vsel %vm179, %v1347, %v1331
  %v1380 = vsel %vm179, %v1348, %v1332
  %v1381 = vsel %vm179, %v1349, %v1333
  %v1382 = vsel %vm179, %v1350, %v1334
  %v1383 = vsel %vm179, %v1351, %v1335
  %v1384 = vsel %vm179, %v1352, %v1336
  %v1385 = vsel %vm179, %v1353, %v1337
  %v1386 = vsel %vm179, %v1354, %v1338
  %v1387 = vsel %vm179, %v1355, %v1339
  %v1388 = vsel %vm179, %v1356, %v1340
  %v1389 = vsel %vm179, %v1357, %v1341
  %v1390 = vsel %vm78, %v1358, %v1310
  %v1391 = vsel %vm79, %v1374, %v1294
  %v1392 = vsel %vm78, %v1359, %v1311
  %v1393 = vsel %vm79, %v1375, %v1295
  %v1394 = vsel %vm78, %v1360, %v1312
  %v1395 = vsel %vm79, %v1376, %v1296
  %v1396 = vsel %vm78, %v1361, %v1313
  %v1397 = vsel %vm79, %v1377, %v1297
  %v1398 = vsel %vm78, %v1362, %v1314
  %v1399 = vsel %vm79, %v1378, %v1298
  %v1400 = vsel %vm78, %v1363, %v1315
  %v1401 = vsel %vm79, %v1379, %v1299
  %v1402 = vsel %vm78, %v1364, %v1316
  %v1403 = vsel %vm79, %v1380, %v1300
  %v1404 = vsel %vm78, %v1365, %v1317
  %v1405 = vsel %vm79, %v1381, %v1301
  %v1406 = vsel %vm78, %v1366, %v1318
  %v1407 = vsel %vm79, %v1382, %v1302
  %v1408 = vsel %vm78, %v1367, %v1319
  %v1409 = vsel %vm79, %v1383, %v1303
  %v1410 = vsel %vm78, %v1368, %v1320
  %v1411 = vsel %vm79, %v1384, %v1304
  %v1412 = vsel %vm78, %v1369, %v1321
  %v1413 = vsel %vm79, %v1385, %v1305
  %v1414 = vsel %vm78, %v1370, %v1322
  %v1415 = vsel %vm79, %v1386, %v1306
  %v1416 = vsel %vm78, %v1371, %v1323
  %v1417 = vsel %vm79, %v1387, %v1307
  %v1418 = vsel %vm78, %v1372, %v1324
  %v1419 = vsel %vm79, %v1388, %v1308
  %v1420 = vsel %vm78, %v1373, %v1325
  %v1421 = vsel %vm79, %v1389, %v1309
  %v1422 = vadd.f32 %v1230, %v1390
  %v1423 = vadd.f32 %v1231, %v1391
  %v1424 = vadd.f32 %v1232, %v1392
  %v1425 = vadd.f32 %v1233, %v1393
  %v1426 = vadd.f32 %v1234, %v1394
  %v1427 = vadd.f32 %v1235, %v1395
  %v1428 = vadd.f32 %v1236, %v1396
  %v1429 = vadd.f32 %v1237, %v1397
  %v1430 = vadd.f32 %v1238, %v1398
  %v1431 = vadd.f32 %v1239, %v1399
  %v1432 = vadd.f32 %v1240, %v1400
  %v1433 = vadd.f32 %v1241, %v1401
  %v1434 = vadd.f32 %v1242, %v1402
  %v1435 = vadd.f32 %v1243, %v1403
  %v1436 = vadd.f32 %v1244, %v1404
  %v1437 = vadd.f32 %v1245, %v1405
  %v1438 = vadd.f32 %v1246, %v1406
  %v1439 = vadd.f32 %v1247, %v1407
  %v1440 = vadd.f32 %v1248, %v1408
  %v1441 = vadd.f32 %v1249, %v1409
  %v1442 = vadd.f32 %v1250, %v1410
  %v1443 = vadd.f32 %v1251, %v1411
  %v1444 = vadd.f32 %v1252, %v1412
  %v1445 = vadd.f32 %v1253, %v1413
  %v1446 = vadd.f32 %v1254, %v1414
  %v1447 = vadd.f32 %v1255, %v1415
  %v1448 = vadd.f32 %v1256, %v1416
  %v1449 = vadd.f32 %v1257, %v1417
  %v1450 = vadd.f32 %v1258, %v1418
  %v1451 = vadd.f32 %v1259, %v1419
  %v1452 = vadd.f32 %v1260, %v1420
  %v1453 = vadd.f32 %v1261, %v1421
  %v1454 = vsel %vm80, %v1310, %v1358
  %v1455 = vsel %vm81, %v1294, %v1374
  %v1456 = vsel %vm80, %v1311, %v1359
  %v1457 = vsel %vm81, %v1295, %v1375
  %v1458 = vsel %vm80, %v1312, %v1360
  %v1459 = vsel %vm81, %v1296, %v1376
  %v1460 = vsel %vm80, %v1313, %v1361
  %v1461 = vsel %vm81, %v1297, %v1377
  %v1462 = vsel %vm80, %v1314, %v1362
  %v1463 = vsel %vm81, %v1298, %v1378
  %v1464 = vsel %vm80, %v1315, %v1363
  %v1465 = vsel %vm81, %v1299, %v1379
  %v1466 = vsel %vm80, %v1316, %v1364
  %v1467 = vsel %vm81, %v1300, %v1380
  %v1468 = vsel %vm80, %v1317, %v1365
  %v1469 = vsel %vm81, %v1301, %v1381
  %v1470 = vsel %vm80, %v1318, %v1366
  %v1471 = vsel %vm81, %v1302, %v1382
  %v1472 = vsel %vm80, %v1319, %v1367
  %v1473 = vsel %vm81, %v1303, %v1383
  %v1474 = vsel %vm80, %v1320, %v1368
  %v1475 = vsel %vm81, %v1304, %v1384
  %v1476 = vsel %vm80, %v1321, %v1369
  %v1477 = vsel %vm81, %v1305, %v1385
  %v1478 = vsel %vm80, %v1322, %v1370
  %v1479 = vsel %vm81, %v1306, %v1386
  %v1480 = vsel %vm80, %v1323, %v1371
  %v1481 = vsel %vm81, %v1307, %v1387
  %v1482 = vsel %vm80, %v1324, %v1372
  %v1483 = vsel %vm81, %v1308, %v1388
  %v1484 = vsel %vm80, %v1325, %v1373
  %v1485 = vsel %vm81, %v1309, %v1389
  %v1486 = vadd.f32 %v1422, %v1454
  %v1487 = vadd.f32 %v1423, %v1455
  %v1488 = vadd.f32 %v1424, %v1456
  %v1489 = vadd.f32 %v1425, %v1457
  %v1490 = vadd.f32 %v1426, %v1458
  %v1491 = vadd.f32 %v1427, %v1459
  %v1492 = vadd.f32 %v1428, %v1460
  %v1493 = vadd.f32 %v1429, %v1461
  %v1494 = vadd.f32 %v1430, %v1462
  %v1495 = vadd.f32 %v1431, %v1463
  %v1496 = vadd.f32 %v1432, %v1464
  %v1497 = vadd.f32 %v1433, %v1465
  %v1498 = vadd.f32 %v1434, %v1466
  %v1499 = vadd.f32 %v1435, %v1467
  %v1500 = vadd.f32 %v1436, %v1468
  %v1501 = vadd.f32 %v1437, %v1469
  %v1502 = vadd.f32 %v1438, %v1470
  %v1503 = vadd.f32 %v1439, %v1471
  %v1504 = vadd.f32 %v1440, %v1472
  %v1505 = vadd.f32 %v1441, %v1473
  %v1506 = vadd.f32 %v1442, %v1474
  %v1507 = vadd.f32 %v1443, %v1475
  %v1508 = vadd.f32 %v1444, %v1476
  %v1509 = vadd.f32 %v1445, %v1477
  %v1510 = vadd.f32 %v1446, %v1478
  %v1511 = vadd.f32 %v1447, %v1479
  %v1512 = vadd.f32 %v1448, %v1480
  %v1513 = vadd.f32 %v1449, %v1481
  %v1514 = vadd.f32 %v1450, %v1482
  %v1515 = vadd.f32 %v1451, %v1483
  %v1516 = vadd.f32 %v1452, %v1484
  %v1517 = vadd.f32 %v1453, %v1485
  %v1518 = vadd.f32 %v1488, %v1486
  %v1519 = vadd.f32 %v1489, %v1487
  %v1520 = vadd.f32 %v1488, %v1490
  %v1521 = vadd.f32 %v1489, %v1491
  %v1522 = vadd.f32 %v1490, %v1492
  %v1523 = vadd.f32 %v1491, %v1493
  %v1524 = vadd.f32 %v1492, %v1494
  %v1525 = vadd.f32 %v1493, %v1495
  %v1526 = vadd.f32 %v1494, %v1496
  %v1527 = vadd.f32 %v1495, %v1497
  %v1528 = vadd.f32 %v1496, %v1498
  %v1529 = vadd.f32 %v1497, %v1499
  %v1530 = vadd.f32 %v1498, %v1500
  %v1531 = vadd.f32 %v1499, %v1501
  %v1532 = vadd.f32 %v1500, %v1502
  %v1533 = vadd.f32 %v1501, %v1503
  %v1534 = vadd.f32 %v1502, %v1504
  %v1535 = vadd.f32 %v1503, %v1505
  %v1536 = vadd.f32 %v1504, %v1506
  %v1537 = vadd.f32 %v1505, %v1507
  %v1538 = vadd.f32 %v1506, %v1508
  %v1539 = vadd.f32 %v1507, %v1509
  %v1540 = vadd.f32 %v1508, %v1510
  %v1541 = vadd.f32 %v1509, %v1511
  %v1542 = vadd.f32 %v1510, %v1512
  %v1543 = vadd.f32 %v1511, %v1513
  %v1544 = vadd.f32 %v1512, %v1514
  %v1545 = vadd.f32 %v1513, %v1515
  %v1546 = vadd.f32 %v1514, %v1516
  %v1547 = vadd.f32 %v1515, %v1517
  %v1548 = vadd.f32 %v1518, %v1488
  %v1549 = vadd.f32 %v1519, %v1489
  %v1550 = vadd.f32 %v1518, %v1490
  %v1551 = vadd.f32 %v1519, %v1491
  %v1552 = vadd.f32 %v1520, %v1492
  %v1553 = vadd.f32 %v1521, %v1493
  %v1554 = vadd.f32 %v1522, %v1494
  %v1555 = vadd.f32 %v1523, %v1495
  %v1556 = vadd.f32 %v1524, %v1496
  %v1557 = vadd.f32 %v1525, %v1497
  %v1558 = vadd.f32 %v1526, %v1498
  %v1559 = vadd.f32 %v1527, %v1499
  %v1560 = vadd.f32 %v1528, %v1500
  %v1561 = vadd.f32 %v1529, %v1501
  %v1562 = vadd.f32 %v1530, %v1502
  %v1563 = vadd.f32 %v1531, %v1503
  %v1564 = vadd.f32 %v1532, %v1504
  %v1565 = vadd.f32 %v1533, %v1505
  %v1566 = vadd.f32 %v1534, %v1506
  %v1567 = vadd.f32 %v1535, %v1507
  %v1568 = vadd.f32 %v1536, %v1508
  %v1569 = vadd.f32 %v1537, %v1509
  %v1570 = vadd.f32 %v1538, %v1510
  %v1571 = vadd.f32 %v1539, %v1511
  %v1572 = vadd.f32 %v1540, %v1512
  %v1573 = vadd.f32 %v1541, %v1513
  %v1574 = vadd.f32 %v1542, %v1514
  %v1575 = vadd.f32 %v1543, %v1515
  %v1576 = vadd.f32 %v1544, %v1516
  %v1577 = vadd.f32 %v1545, %v1517
  %v1578 = vadd.f32 %v1546, %v1514
  %v1579 = vadd.f32 %v1547, %v1515
  %v1580 = vmul.f32 %v1548, 0.11111111
  %v1581 = vmul.f32 %v1549, 0.11111111
  %v1582 = vmul.f32 %v1550, 0.11111111
  %v1583 = vmul.f32 %v1551, 0.11111111
  %v1584 = vmul.f32 %v1552, 0.11111111
  %v1585 = vmul.f32 %v1553, 0.11111111
  %v1586 = vmul.f32 %v1554, 0.11111111
  %v1587 = vmul.f32 %v1555, 0.11111111
  %v1588 = vmul.f32 %v1556, 0.11111111
  %v1589 = vmul.f32 %v1557, 0.11111111
  %v1590 = vmul.f32 %v1558, 0.11111111
  %v1591 = vmul.f32 %v1559, 0.11111111
  %v1592 = vmul.f32 %v1560, 0.11111111
  %v1593 = vmul.f32 %v1561, 0.11111111
  %v1594 = vmul.f32 %v1562, 0.11111111
  %v1595 = vmul.f32 %v1563, 0.11111111
  %v1596 = vmul.f32 %v1564, 0.11111111
  %v1597 = vmul.f32 %v1565, 0.11111111
  %v1598 = vmul.f32 %v1566, 0.11111111
  %v1599 = vmul.f32 %v1567, 0.11111111
  %v1600 = vmul.f32 %v1568, 0.11111111
  %v1601 = vmul.f32 %v1569, 0.11111111
  %v1602 = vmul.f32 %v1570, 0.11111111
  %v1603 = vmul.f32 %v1571, 0.11111111
  %v1604 = vmul.f32 %v1572, 0.11111111
  %v1605 = vmul.f32 %v1573, 0.11111111
  %v1606 = vmul.f32 %v1574, 0.11111111
  %v1607 = vmul.f32 %v1575, 0.11111111
  %v1608 = vmul.f32 %v1576, 0.11111111
  %v1609 = vmul.f32 %v1577, 0.11111111
  %v1610 = vmul.f32 %v1578, 0.11111111
  %v1611 = vmul.f32 %v1579, 0.11111111
  %v1612 = vmul.f32 %v752, %v752
  %v1613 = vmul.f32 %v753, %v753
  %v1614 = vmul.f32 %v754, %v754
  %v1615 = vmul.f32 %v755, %v755
  %v1616 = vmul.f32 %v756, %v756
  %v1617 = vmul.f32 %v757, %v757
  %v1618 = vmul.f32 %v758, %v758
  %v1619 = vmul.f32 %v759, %v759
  %v1620 = vmul.f32 %v760, %v760
  %v1621 = vmul.f32 %v761, %v761
  %v1622 = vmul.f32 %v762, %v762
  %v1623 = vmul.f32 %v763, %v763
  %v1624 = vmul.f32 %v764, %v764
  %v1625 = vmul.f32 %v765, %v765
  %v1626 = vmul.f32 %v766, %v766
  %v1627 = vmul.f32 %v767, %v767
  %v1628 = vmul.f32 %v768, %v768
  %v1629 = vmul.f32 %v769, %v769
  %v1630 = vmul.f32 %v770, %v770
  %v1631 = vmul.f32 %v771, %v771
  %v1632 = vmul.f32 %v772, %v772
  %v1633 = vmul.f32 %v773, %v773
  %v1634 = vmul.f32 %v774, %v774
  %v1635 = vmul.f32 %v775, %v775
  %v1636 = vmul.f32 %v776, %v776
  %v1637 = vmul.f32 %v777, %v777
  %v1638 = vmul.f32 %v778, %v778
  %v1639 = vmul.f32 %v779, %v779
  %v1640 = vmul.f32 %v780, %v780
  %v1641 = vmul.f32 %v781, %v781
  %v1642 = vmul.f32 %v782, %v782
  %v1643 = vmul.f32 %v783, %v783
  %v1644 = vsub.f32 %v1580, %v1612
  %v1645 = vsub.f32 %v1581, %v1613
  %v1646 = vsub.f32 %v1582, %v1614
  %v1647 = vsub.f32 %v1583, %v1615
  %v1648 = vsub.f32 %v1584, %v1616
  %v1649 = vsub.f32 %v1585, %v1617
  %v1650 = vsub.f32 %v1586, %v1618
  %v1651 = vsub.f32 %v1587, %v1619
  %v1652 = vsub.f32 %v1588, %v1620
  %v1653 = vsub.f32 %v1589, %v1621
  %v1654 = vsub.f32 %v1590, %v1622
  %v1655 = vsub.f32 %v1591, %v1623
  %v1656 = vsub.f32 %v1592, %v1624
  %v1657 = vsub.f32 %v1593, %v1625
  %v1658 = vsub.f32 %v1594, %v1626
  %v1659 = vsub.f32 %v1595, %v1627
  %v1660 = vsub.f32 %v1596, %v1628
  %v1661 = vsub.f32 %v1597, %v1629
  %v1662 = vsub.f32 %v1598, %v1630
  %v1663 = vsub.f32 %v1599, %v1631
  %v1664 = vsub.f32 %v1600, %v1632
  %v1665 = vsub.f32 %v1601, %v1633
  %v1666 = vsub.f32 %v1602, %v1634
  %v1667 = vsub.f32 %v1603, %v1635
  %v1668 = vsub.f32 %v1604, %v1636
  %v1669 = vsub.f32 %v1605, %v1637
  %v1670 = vsub.f32 %v1606, %v1638
  %v1671 = vsub.f32 %v1607, %v1639
  %v1672 = vsub.f32 %v1608, %v1640
  %v1673 = vsub.f32 %v1609, %v1641
  %v1674 = vsub.f32 %v1610, %v1642
  %v1675 = vsub.f32 %v1611, %v1643
  %v1676 = vmul.f32 %v11, %v43
  %v1677 = vmul.f32 %v12, %v44
  %v1678 = vmul.f32 %v13, %v45
  %v1679 = vmul.f32 %v14, %v46
  %v1680 = vmul.f32 %v15, %v47
  %v1681 = vmul.f32 %v16, %v48
  %v1682 = vmul.f32 %v17, %v49
  %v1683 = vmul.f32 %v18, %v50
  %v1684 = vmul.f32 %v19, %v51
  %v1685 = vmul.f32 %v20, %v52
  %v1686 = vmul.f32 %v21, %v53
  %v1687 = vmul.f32 %v22, %v54
  %v1688 = vmul.f32 %v23, %v55
  %v1689 = vmul.f32 %v24, %v56
  %v1690 = vmul.f32 %v25, %v57
  %v1691 = vmul.f32 %v26, %v58
  %v1692 = vmul.f32 %v27, %v59
  %v1693 = vmul.f32 %v28, %v60
  %v1694 = vmul.f32 %v29, %v61
  %v1695 = vmul.f32 %v30, %v62
  %v1696 = vmul.f32 %v31, %v63
  %v1697 = vmul.f32 %v32, %v64
  %v1698 = vmul.f32 %v33, %v65
  %v1699 = vmul.f32 %v34, %v66
  %v1700 = vmul.f32 %v35, %v67
  %v1701 = vmul.f32 %v36, %v68
  %v1702 = vmul.f32 %v37, %v69
  %v1703 = vmul.f32 %v38, %v70
  %v1704 = vmul.f32 %v39, %v71
  %v1705 = vmul.f32 %v40, %v72
  %v1706 = vmul.f32 %v41, %v73
  %v1707 = vmul.f32 %v42, %v74
  %v1708 = vrot.slane %v1676, 7
  %v1709 = vrot.slane %v1678, 7
  %v1710 = vrot.slane %v1680, 7
  %v1711 = vrot.slane %v1682, 7
  %v1712 = vrot.slane %v1684, 7
  %v1713 = vrot.slane %v1686, 7
  %v1714 = vrot.slane %v1688, 7
  %v1715 = vrot.slane %v1690, 7
  %v1716 = vrot.slane %v1692, 7
  %v1717 = vrot.slane %v1694, 7
  %v1718 = vrot.slane %v1696, 7
  %v1719 = vrot.slane %v1698, 7
  %v1720 = vrot.slane %v1700, 7
  %v1721 = vrot.slane %v1702, 7
  %v1722 = vrot.slane %v1704, 7
  %v1723 = vrot.slane %v1706, 7
  %v1724 = vrot.slane %v1677, 7
  %v1725 = vrot.slane %v1679, 7
  %v1726 = vrot.slane %v1681, 7
  %v1727 = vrot.slane %v1683, 7
  %v1728 = vrot.slane %v1685, 7
  %v1729 = vrot.slane %v1687, 7
  %v1730 = vrot.slane %v1689, 7
  %v1731 = vrot.slane %v1691, 7
  %v1732 = vrot.slane %v1693, 7
  %v1733 = vrot.slane %v1695, 7
  %v1734 = vrot.slane %v1697, 7
  %v1735 = vrot.slane %v1699, 7
  %v1736 = vrot.slane %v1701, 7
  %v1737 = vrot.slane %v1703, 7
  %v1738 = vrot.slane %v1705, 7
  %v1739 = vrot.slane %v1707, 7
  %v1740 = vsel %vm114, %v1708, %v1724
  %v1741 = vsel %vm114, %v1709, %v1725
  %v1742 = vsel %vm114, %v1710, %v1726
  %v1743 = vsel %vm114, %v1711, %v1727
  %v1744 = vsel %vm114, %v1712, %v1728
  %v1745 = vsel %vm114, %v1713, %v1729
  %v1746 = vsel %vm114, %v1714, %v1730
  %v1747 = vsel %vm114, %v1715, %v1731
  %v1748 = vsel %vm114, %v1716, %v1732
  %v1749 = vsel %vm114, %v1717, %v1733
  %v1750 = vsel %vm114, %v1718, %v1734
  %v1751 = vsel %vm114, %v1719, %v1735
  %v1752 = vsel %vm114, %v1720, %v1736
  %v1753 = vsel %vm114, %v1721, %v1737
  %v1754 = vsel %vm114, %v1722, %v1738
  %v1755 = vsel %vm114, %v1723, %v1739
  %v1756 = vsel %vm114, %v1724, %v1708
  %v1757 = vsel %vm114, %v1725, %v1709
  %v1758 = vsel %vm114, %v1726, %v1710
  %v1759 = vsel %vm114, %v1727, %v1711
  %v1760 = vsel %vm114, %v1728, %v1712
  %v1761 = vsel %vm114, %v1729, %v1713
  %v1762 = vsel %vm114, %v1730, %v1714
  %v1763 = vsel %vm114, %v1731, %v1715
  %v1764 = vsel %vm114, %v1732, %v1716
  %v1765 = vsel %vm114, %v1733, %v1717
  %v1766 = vsel %vm114, %v1734, %v1718
  %v1767 = vsel %vm114, %v1735, %v1719
  %v1768 = vsel %vm114, %v1736, %v1720
  %v1769 = vsel %vm114, %v1737, %v1721
  %v1770 = vsel %vm114, %v1738, %v1722
  %v1771 = vsel %vm114, %v1739, %v1723
  %v1772 = vrot.slane %v1676, 1
  %v1773 = vrot.slane %v1678, 1
  %v1774 = vrot.slane %v1680, 1
  %v1775 = vrot.slane %v1682, 1
  %v1776 = vrot.slane %v1684, 1
  %v1777 = vrot.slane %v1686, 1
  %v1778 = vrot.slane %v1688, 1
  %v1779 = vrot.slane %v1690, 1
  %v1780 = vrot.slane %v1692, 1
  %v1781 = vrot.slane %v1694, 1
  %v1782 = vrot.slane %v1696, 1
  %v1783 = vrot.slane %v1698, 1
  %v1784 = vrot.slane %v1700, 1
  %v1785 = vrot.slane %v1702, 1
  %v1786 = vrot.slane %v1704, 1
  %v1787 = vrot.slane %v1706, 1
  %v1788 = vrot.slane %v1677, 1
  %v1789 = vrot.slane %v1679, 1
  %v1790 = vrot.slane %v1681, 1
  %v1791 = vrot.slane %v1683, 1
  %v1792 = vrot.slane %v1685, 1
  %v1793 = vrot.slane %v1687, 1
  %v1794 = vrot.slane %v1689, 1
  %v1795 = vrot.slane %v1691, 1
  %v1796 = vrot.slane %v1693, 1
  %v1797 = vrot.slane %v1695, 1
  %v1798 = vrot.slane %v1697, 1
  %v1799 = vrot.slane %v1699, 1
  %v1800 = vrot.slane %v1701, 1
  %v1801 = vrot.slane %v1703, 1
  %v1802 = vrot.slane %v1705, 1
  %v1803 = vrot.slane %v1707, 1
  %v1804 = vsel %vm179, %v1772, %v1788
  %v1805 = vsel %vm179, %v1773, %v1789
  %v1806 = vsel %vm179, %v1774, %v1790
  %v1807 = vsel %vm179, %v1775, %v1791
  %v1808 = vsel %vm179, %v1776, %v1792
  %v1809 = vsel %vm179, %v1777, %v1793
  %v1810 = vsel %vm179, %v1778, %v1794
  %v1811 = vsel %vm179, %v1779, %v1795
  %v1812 = vsel %vm179, %v1780, %v1796
  %v1813 = vsel %vm179, %v1781, %v1797
  %v1814 = vsel %vm179, %v1782, %v1798
  %v1815 = vsel %vm179, %v1783, %v1799
  %v1816 = vsel %vm179, %v1784, %v1800
  %v1817 = vsel %vm179, %v1785, %v1801
  %v1818 = vsel %vm179, %v1786, %v1802
  %v1819 = vsel %vm179, %v1787, %v1803
  %v1820 = vsel %vm179, %v1788, %v1772
  %v1821 = vsel %vm179, %v1789, %v1773
  %v1822 = vsel %vm179, %v1790, %v1774
  %v1823 = vsel %vm179, %v1791, %v1775
  %v1824 = vsel %vm179, %v1792, %v1776
  %v1825 = vsel %vm179, %v1793, %v1777
  %v1826 = vsel %vm179, %v1794, %v1778
  %v1827 = vsel %vm179, %v1795, %v1779
  %v1828 = vsel %vm179, %v1796, %v1780
  %v1829 = vsel %vm179, %v1797, %v1781
  %v1830 = vsel %vm179, %v1798, %v1782
  %v1831 = vsel %vm179, %v1799, %v1783
  %v1832 = vsel %vm179, %v1800, %v1784
  %v1833 = vsel %vm179, %v1801, %v1785
  %v1834 = vsel %vm179, %v1802, %v1786
  %v1835 = vsel %vm179, %v1803, %v1787
  %v1836 = vsel %vm78, %v1804, %v1756
  %v1837 = vsel %vm79, %v1820, %v1740
  %v1838 = vsel %vm78, %v1805, %v1757
  %v1839 = vsel %vm79, %v1821, %v1741
  %v1840 = vsel %vm78, %v1806, %v1758
  %v1841 = vsel %vm79, %v1822, %v1742
  %v1842 = vsel %vm78, %v1807, %v1759
  %v1843 = vsel %vm79, %v1823, %v1743
  %v1844 = vsel %vm78, %v1808, %v1760
  %v1845 = vsel %vm79, %v1824, %v1744
  %v1846 = vsel %vm78, %v1809, %v1761
  %v1847 = vsel %vm79, %v1825, %v1745
  %v1848 = vsel %vm78, %v1810, %v1762
  %v1849 = vsel %vm79, %v1826, %v1746
  %v1850 = vsel %vm78, %v1811, %v1763
  %v1851 = vsel %vm79, %v1827, %v1747
  %v1852 = vsel %vm78, %v1812, %v1764
  %v1853 = vsel %vm79, %v1828, %v1748
  %v1854 = vsel %vm78, %v1813, %v1765
  %v1855 = vsel %vm79, %v1829, %v1749
  %v1856 = vsel %vm78, %v1814, %v1766
  %v1857 = vsel %vm79, %v1830, %v1750
  %v1858 = vsel %vm78, %v1815, %v1767
  %v1859 = vsel %vm79, %v1831, %v1751
  %v1860 = vsel %vm78, %v1816, %v1768
  %v1861 = vsel %vm79, %v1832, %v1752
  %v1862 = vsel %vm78, %v1817, %v1769
  %v1863 = vsel %vm79, %v1833, %v1753
  %v1864 = vsel %vm78, %v1818, %v1770
  %v1865 = vsel %vm79, %v1834, %v1754
  %v1866 = vsel %vm78, %v1819, %v1771
  %v1867 = vsel %vm79, %v1835, %v1755
  %v1868 = vadd.f32 %v1676, %v1836
  %v1869 = vadd.f32 %v1677, %v1837
  %v1870 = vadd.f32 %v1678, %v1838
  %v1871 = vadd.f32 %v1679, %v1839
  %v1872 = vadd.f32 %v1680, %v1840
  %v1873 = vadd.f32 %v1681, %v1841
  %v1874 = vadd.f32 %v1682, %v1842
  %v1875 = vadd.f32 %v1683, %v1843
  %v1876 = vadd.f32 %v1684, %v1844
  %v1877 = vadd.f32 %v1685, %v1845
  %v1878 = vadd.f32 %v1686, %v1846
  %v1879 = vadd.f32 %v1687, %v1847
  %v1880 = vadd.f32 %v1688, %v1848
  %v1881 = vadd.f32 %v1689, %v1849
  %v1882 = vadd.f32 %v1690, %v1850
  %v1883 = vadd.f32 %v1691, %v1851
  %v1884 = vadd.f32 %v1692, %v1852
  %v1885 = vadd.f32 %v1693, %v1853
  %v1886 = vadd.f32 %v1694, %v1854
  %v1887 = vadd.f32 %v1695, %v1855
  %v1888 = vadd.f32 %v1696, %v1856
  %v1889 = vadd.f32 %v1697, %v1857
  %v1890 = vadd.f32 %v1698, %v1858
  %v1891 = vadd.f32 %v1699, %v1859
  %v1892 = vadd.f32 %v1700, %v1860
  %v1893 = vadd.f32 %v1701, %v1861
  %v1894 = vadd.f32 %v1702, %v1862
  %v1895 = vadd.f32 %v1703, %v1863
  %v1896 = vadd.f32 %v1704, %v1864
  %v1897 = vadd.f32 %v1705, %v1865
  %v1898 = vadd.f32 %v1706, %v1866
  %v1899 = vadd.f32 %v1707, %v1867
  %v1900 = vsel %vm80, %v1756, %v1804
  %v1901 = vsel %vm81, %v1740, %v1820
  %v1902 = vsel %vm80, %v1757, %v1805
  %v1903 = vsel %vm81, %v1741, %v1821
  %v1904 = vsel %vm80, %v1758, %v1806
  %v1905 = vsel %vm81, %v1742, %v1822
  %v1906 = vsel %vm80, %v1759, %v1807
  %v1907 = vsel %vm81, %v1743, %v1823
  %v1908 = vsel %vm80, %v1760, %v1808
  %v1909 = vsel %vm81, %v1744, %v1824
  %v1910 = vsel %vm80, %v1761, %v1809
  %v1911 = vsel %vm81, %v1745, %v1825
  %v1912 = vsel %vm80, %v1762, %v1810
  %v1913 = vsel %vm81, %v1746, %v1826
  %v1914 = vsel %vm80, %v1763, %v1811
  %v1915 = vsel %vm81, %v1747, %v1827
  %v1916 = vsel %vm80, %v1764, %v1812
  %v1917 = vsel %vm81, %v1748, %v1828
  %v1918 = vsel %vm80, %v1765, %v1813
  %v1919 = vsel %vm81, %v1749, %v1829
  %v1920 = vsel %vm80, %v1766, %v1814
  %v1921 = vsel %vm81, %v1750, %v1830
  %v1922 = vsel %vm80, %v1767, %v1815
  %v1923 = vsel %vm81, %v1751, %v1831
  %v1924 = vsel %vm80, %v1768, %v1816
  %v1925 = vsel %vm81, %v1752, %v1832
  %v1926 = vsel %vm80, %v1769, %v1817
  %v1927 = vsel %vm81, %v1753, %v1833
  %v1928 = vsel %vm80, %v1770, %v1818
  %v1929 = vsel %vm81, %v1754, %v1834
  %v1930 = vsel %vm80, %v1771, %v1819
  %v1931 = vsel %vm81, %v1755, %v1835
  %v1932 = vadd.f32 %v1868, %v1900
  %v1933 = vadd.f32 %v1869, %v1901
  %v1934 = vadd.f32 %v1870, %v1902
  %v1935 = vadd.f32 %v1871, %v1903
  %v1936 = vadd.f32 %v1872, %v1904
  %v1937 = vadd.f32 %v1873, %v1905
  %v1938 = vadd.f32 %v1874, %v1906
  %v1939 = vadd.f32 %v1875, %v1907
  %v1940 = vadd.f32 %v1876, %v1908
  %v1941 = vadd.f32 %v1877, %v1909
  %v1942 = vadd.f32 %v1878, %v1910
  %v1943 = vadd.f32 %v1879, %v1911
  %v1944 = vadd.f32 %v1880, %v1912
  %v1945 = vadd.f32 %v1881, %v1913
  %v1946 = vadd.f32 %v1882, %v1914
  %v1947 = vadd.f32 %v1883, %v1915
  %v1948 = vadd.f32 %v1884, %v1916
  %v1949 = vadd.f32 %v1885, %v1917
  %v1950 = vadd.f32 %v1886, %v1918
  %v1951 = vadd.f32 %v1887, %v1919
  %v1952 = vadd.f32 %v1888, %v1920
  %v1953 = vadd.f32 %v1889, %v1921
  %v1954 = vadd.f32 %v1890, %v1922
  %v1955 = vadd.f32 %v1891, %v1923
  %v1956 = vadd.f32 %v1892, %v1924
  %v1957 = vadd.f32 %v1893, %v1925
  %v1958 = vadd.f32 %v1894, %v1926
  %v1959 = vadd.f32 %v1895, %v1927
  %v1960 = vadd.f32 %v1896, %v1928
  %v1961 = vadd.f32 %v1897, %v1929
  %v1962 = vadd.f32 %v1898, %v1930
  %v1963 = vadd.f32 %v1899, %v1931
  %v1964 = vadd.f32 %v1934, %v1932
  %v1965 = vadd.f32 %v1935, %v1933
  %v1966 = vadd.f32 %v1934, %v1936
  %v1967 = vadd.f32 %v1935, %v1937
  %v1968 = vadd.f32 %v1936, %v1938
  %v1969 = vadd.f32 %v1937, %v1939
  %v1970 = vadd.f32 %v1938, %v1940
  %v1971 = vadd.f32 %v1939, %v1941
  %v1972 = vadd.f32 %v1940, %v1942
  %v1973 = vadd.f32 %v1941, %v1943
  %v1974 = vadd.f32 %v1942, %v1944
  %v1975 = vadd.f32 %v1943, %v1945
  %v1976 = vadd.f32 %v1944, %v1946
  %v1977 = vadd.f32 %v1945, %v1947
  %v1978 = vadd.f32 %v1946, %v1948
  %v1979 = vadd.f32 %v1947, %v1949
  %v1980 = vadd.f32 %v1948, %v1950
  %v1981 = vadd.f32 %v1949, %v1951
  %v1982 = vadd.f32 %v1950, %v1952
  %v1983 = vadd.f32 %v1951, %v1953
  %v1984 = vadd.f32 %v1952, %v1954
  %v1985 = vadd.f32 %v1953, %v1955
  %v1986 = vadd.f32 %v1954, %v1956
  %v1987 = vadd.f32 %v1955, %v1957
  %v1988 = vadd.f32 %v1956, %v1958
  %v1989 = vadd.f32 %v1957, %v1959
  %v1990 = vadd.f32 %v1958, %v1960
  %v1991 = vadd.f32 %v1959, %v1961
  %v1992 = vadd.f32 %v1960, %v1962
  %v1993 = vadd.f32 %v1961, %v1963
  %v1994 = vadd.f32 %v1964, %v1934
  %v1995 = vadd.f32 %v1965, %v1935
  %v1996 = vadd.f32 %v1964, %v1936
  %v1997 = vadd.f32 %v1965, %v1937
  %v1998 = vadd.f32 %v1966, %v1938
  %v1999 = vadd.f32 %v1967, %v1939
  %v2000 = vadd.f32 %v1968, %v1940
  %v2001 = vadd.f32 %v1969, %v1941
  %v2002 = vadd.f32 %v1970, %v1942
  %v2003 = vadd.f32 %v1971, %v1943
  %v2004 = vadd.f32 %v1972, %v1944
  %v2005 = vadd.f32 %v1973, %v1945
  %v2006 = vadd.f32 %v1974, %v1946
  %v2007 = vadd.f32 %v1975, %v1947
  %v2008 = vadd.f32 %v1976, %v1948
  %v2009 = vadd.f32 %v1977, %v1949
  %v2010 = vadd.f32 %v1978, %v1950
  %v2011 = vadd.f32 %v1979, %v1951
  %v2012 = vadd.f32 %v1980, %v1952
  %v2013 = vadd.f32 %v1981, %v1953
  %v2014 = vadd.f32 %v1982, %v1954
  %v2015 = vadd.f32 %v1983, %v1955
  %v2016 = vadd.f32 %v1984, %v1956
  %v2017 = vadd.f32 %v1985, %v1957
  %v2018 = vadd.f32 %v1986, %v1958
  %v2019 = vadd.f32 %v1987, %v1959
  %v2020 = vadd.f32 %v1988, %v1960
  %v2021 = vadd.f32 %v1989, %v1961
  %v2022 = vadd.f32 %v1990, %v1962
  %v2023 = vadd.f32 %v1991, %v1963
  %v2024 = vadd.f32 %v1992, %v1960
  %v2025 = vadd.f32 %v1993, %v1961
  %v2026 = vmul.f32 %v1994, 0.11111111
  %v2027 = vmul.f32 %v1995, 0.11111111
  %v2028 = vmul.f32 %v1996, 0.11111111
  %v2029 = vmul.f32 %v1997, 0.11111111
  %v2030 = vmul.f32 %v1998, 0.11111111
  %v2031 = vmul.f32 %v1999, 0.11111111
  %v2032 = vmul.f32 %v2000, 0.11111111
  %v2033 = vmul.f32 %v2001, 0.11111111
  %v2034 = vmul.f32 %v2002, 0.11111111
  %v2035 = vmul.f32 %v2003, 0.11111111
  %v2036 = vmul.f32 %v2004, 0.11111111
  %v2037 = vmul.f32 %v2005, 0.11111111
  %v2038 = vmul.f32 %v2006, 0.11111111
  %v2039 = vmul.f32 %v2007, 0.11111111
  %v2040 = vmul.f32 %v2008, 0.11111111
  %v2041 = vmul.f32 %v2009, 0.11111111
  %v2042 = vmul.f32 %v2010, 0.11111111
  %v2043 = vmul.f32 %v2011, 0.11111111
  %v2044 = vmul.f32 %v2012, 0.11111111
  %v2045 = vmul.f32 %v2013, 0.11111111
  %v2046 = vmul.f32 %v2014, 0.11111111
  %v2047 = vmul.f32 %v2015, 0.11111111
  %v2048 = vmul.f32 %v2016, 0.11111111
  %v2049 = vmul.f32 %v2017, 0.11111111
  %v2050 = vmul.f32 %v2018, 0.11111111
  %v2051 = vmul.f32 %v2019, 0.11111111
  %v2052 = vmul.f32 %v2020, 0.11111111
  %v2053 = vmul.f32 %v2021, 0.11111111
  %v2054 = vmul.f32 %v2022, 0.11111111
  %v2055 = vmul.f32 %v2023, 0.11111111
  %v2056 = vmul.f32 %v2024, 0.11111111
  %v2057 = vmul.f32 %v2025, 0.11111111
  %v2058 = vmul.f32 %v402, %v752
  %v2059 = vmul.f32 %v403, %v753
  %v2060 = vmul.f32 %v404, %v754
  %v2061 = vmul.f32 %v405, %v755
  %v2062 = vmul.f32 %v406, %v756
  %v2063 = vmul.f32 %v407, %v757
  %v2064 = vmul.f32 %v408, %v758
  %v2065 = vmul.f32 %v409, %v759
  %v2066 = vmul.f32 %v410, %v760
  %v2067 = vmul.f32 %v411, %v761
  %v2068 = vmul.f32 %v412, %v762
  %v2069 = vmul.f32 %v413, %v763
  %v2070 = vmul.f32 %v414, %v764
  %v2071 = vmul.f32 %v415, %v765
  %v2072 = vmul.f32 %v416, %v766
  %v2073 = vmul.f32 %v417, %v767
  %v2074 = vmul.f32 %v418, %v768
  %v2075 = vmul.f32 %v419, %v769
  %v2076 = vmul.f32 %v420, %v770
  %v2077 = vmul.f32 %v421, %v771
  %v2078 = vmul.f32 %v422, %v772
  %v2079 = vmul.f32 %v423, %v773
  %v2080 = vmul.f32 %v424, %v774
  %v2081 = vmul.f32 %v425, %v775
  %v2082 = vmul.f32 %v426, %v776
  %v2083 = vmul.f32 %v427, %v777
  %v2084 = vmul.f32 %v428, %v778
  %v2085 = vmul.f32 %v429, %v779
  %v2086 = vmul.f32 %v430, %v780
  %v2087 = vmul.f32 %v431, %v781
  %v2088 = vmul.f32 %v432, %v782
  %v2089 = vmul.f32 %v433, %v783
  %v2090 = vsub.f32 %v2026, %v2058
  %v2091 = vsub.f32 %v2027, %v2059
  %v2092 = vsub.f32 %v2028, %v2060
  %v2093 = vsub.f32 %v2029, %v2061
  %v2094 = vsub.f32 %v2030, %v2062
  %v2095 = vsub.f32 %v2031, %v2063
  %v2096 = vsub.f32 %v2032, %v2064
  %v2097 = vsub.f32 %v2033, %v2065
  %v2098 = vsub.f32 %v2034, %v2066
  %v2099 = vsub.f32 %v2035, %v2067
  %v2100 = vsub.f32 %v2036, %v2068
  %v2101 = vsub.f32 %v2037, %v2069
  %v2102 = vsub.f32 %v2038, %v2070
  %v2103 = vsub.f32 %v2039, %v2071
  %v2104 = vsub.f32 %v2040, %v2072
  %v2105 = vsub.f32 %v2041, %v2073
  %v2106 = vsub.f32 %v2042, %v2074
  %v2107 = vsub.f32 %v2043, %v2075
  %v2108 = vsub.f32 %v2044, %v2076
  %v2109 = vsub.f32 %v2045, %v2077
  %v2110 = vsub.f32 %v2046, %v2078
  %v2111 = vsub.f32 %v2047, %v2079
  %v2112 = vsub.f32 %v2048, %v2080
  %v2113 = vsub.f32 %v2049, %v2081
  %v2114 = vsub.f32 %v2050, %v2082
  %v2115 = vsub.f32 %v2051, %v2083
  %v2116 = vsub.f32 %v2052, %v2084
  %v2117 = vsub.f32 %v2053, %v2085
  %v2118 = vsub.f32 %v2054, %v2086
  %v2119 = vsub.f32 %v2055, %v2087
  %v2120 = vsub.f32 %v2056, %v2088
  %v2121 = vsub.f32 %v2057, %v2089
  %v2122 = vmul.f32 %v402, 2.0
  %v2123 = vmul.f32 %v403, 2.0
  %v2124 = vmul.f32 %v404, 2.0
  %v2125 = vmul.f32 %v405, 2.0
  %v2126 = vmul.f32 %v406, 2.0
  %v2127 = vmul.f32 %v407, 2.0
  %v2128 = vmul.f32 %v408, 2.0
  %v2129 = vmul.f32 %v409, 2.0
  %v2130 = vmul.f32 %v410, 2.0
  %v2131 = vmul.f32 %v411, 2.0
  %v2132 = vmul.f32 %v412, 2.0
  %v2133 = vmul.f32 %v413, 2.0
  %v2134 = vmul.f32 %v414, 2.0
  %v2135 = vmul.f32 %v415, 2.0
  %v2136 = vmul.f32 %v416, 2.0
  %v2137 = vmul.f32 %v417, 2.0
  %v2138 = vmul.f32 %v418, 2.0
  %v2139 = vmul.f32 %v419, 2.0
  %v2140 = vmul.f32 %v420, 2.0
  %v2141 = vmul.f32 %v421, 2.0
  %v2142 = vmul.f32 %v422, 2.0
  %v2143 = vmul.f32 %v423, 2.0
  %v2144 = vmul.f32 %v424, 2.0
  %v2145 = vmul.f32 %v425, 2.0
  %v2146 = vmul.f32 %v426, 2.0
  %v2147 = vmul.f32 %v427, 2.0
  %v2148 = vmul.f32 %v428, 2.0
  %v2149 = vmul.f32 %v429, 2.0
  %v2150 = vmul.f32 %v430, 2.0
  %v2151 = vmul.f32 %v431, 2.0
  %v2152 = vmul.f32 %v432, 2.0
  %v2153 = vmul.f32 %v433, 2.0
  %v2154 = vmul.f32 %v2122, %v752
  %v2155 = vmul.f32 %v2123, %v753
  %v2156 = vmul.f32 %v2124, %v754
  %v2157 = vmul.f32 %v2125, %v755
  %v2158 = vmul.f32 %v2126, %v756
  %v2159 = vmul.f32 %v2127, %v757
  %v2160 = vmul.f32 %v2128, %v758
  %v2161 = vmul.f32 %v2129, %v759
  %v2162 = vmul.f32 %v2130, %v760
  %v2163 = vmul.f32 %v2131, %v761
  %v2164 = vmul.f32 %v2132, %v762
  %v2165 = vmul.f32 %v2133, %v763
  %v2166 = vmul.f32 %v2134, %v764
  %v2167 = vmul.f32 %v2135, %v765
  %v2168 = vmul.f32 %v2136, %v766
  %v2169 = vmul.f32 %v2137, %v767
  %v2170 = vmul.f32 %v2138, %v768
  %v2171 = vmul.f32 %v2139, %v769
  %v2172 = vmul.f32 %v2140, %v770
  %v2173 = vmul.f32 %v2141, %v771
  %v2174 = vmul.f32 %v2142, %v772
  %v2175 = vmul.f32 %v2143, %v773
  %v2176 = vmul.f32 %v2144, %v774
  %v2177 = vmul.f32 %v2145, %v775
  %v2178 = vmul.f32 %v2146, %v776
  %v2179 = vmul.f32 %v2147, %v777
  %v2180 = vmul.f32 %v2148, %v778
  %v2181 = vmul.f32 %v2149, %v779
  %v2182 = vmul.f32 %v2150, %v780
  %v2183 = vmul.f32 %v2151, %v781
  %v2184 = vmul.f32 %v2152, %v782
  %v2185 = vmul.f32 %v2153, %v783
  %v2186 = vadd.f32 %v2154, 0.0001
  %v2187 = vadd.f32 %v2155, 0.0001
  %v2188 = vadd.f32 %v2156, 0.0001
  %v2189 = vadd.f32 %v2157, 0.0001
  %v2190 = vadd.f32 %v2158, 0.0001
  %v2191 = vadd.f32 %v2159, 0.0001
  %v2192 = vadd.f32 %v2160, 0.0001
  %v2193 = vadd.f32 %v2161, 0.0001
  %v2194 = vadd.f32 %v2162, 0.0001
  %v2195 = vadd.f32 %v2163, 0.0001
  %v2196 = vadd.f32 %v2164, 0.0001
  %v2197 = vadd.f32 %v2165, 0.0001
  %v2198 = vadd.f32 %v2166, 0.0001
  %v2199 = vadd.f32 %v2167, 0.0001
  %v2200 = vadd.f32 %v2168, 0.0001
  %v2201 = vadd.f32 %v2169, 0.0001
  %v2202 = vadd.f32 %v2170, 0.0001
  %v2203 = vadd.f32 %v2171, 0.0001
  %v2204 = vadd.f32 %v2172, 0.0001
  %v2205 = vadd.f32 %v2173, 0.0001
  %v2206 = vadd.f32 %v2174, 0.0001
  %v2207 = vadd.f32 %v2175, 0.0001
  %v2208 = vadd.f32 %v2176, 0.0001
  %v2209 = vadd.f32 %v2177, 0.0001
  %v2210 = vadd.f32 %v2178, 0.0001
  %v2211 = vadd.f32 %v2179, 0.0001
  %v2212 = vadd.f32 %v2180, 0.0001
  %v2213 = vadd.f32 %v2181, 0.0001
  %v2214 = vadd.f32 %v2182, 0.0001
  %v2215 = vadd.f32 %v2183, 0.0001
  %v2216 = vadd.f32 %v2184, 0.0001
  %v2217 = vadd.f32 %v2185, 0.0001
  %v2218 = vmul.f32 %v2090, 2.0
  %v2219 = vmul.f32 %v2091, 2.0
  %v2220 = vmul.f32 %v2092, 2.0
  %v2221 = vmul.f32 %v2093, 2.0
  %v2222 = vmul.f32 %v2094, 2.0
  %v2223 = vmul.f32 %v2095, 2.0
  %v2224 = vmul.f32 %v2096, 2.0
  %v2225 = vmul.f32 %v2097, 2.0
  %v2226 = vmul.f32 %v2098, 2.0
  %v2227 = vmul.f32 %v2099, 2.0
  %v2228 = vmul.f32 %v2100, 2.0
  %v2229 = vmul.f32 %v2101, 2.0
  %v2230 = vmul.f32 %v2102, 2.0
  %v2231 = vmul.f32 %v2103, 2.0
  %v2232 = vmul.f32 %v2104, 2.0
  %v2233 = vmul.f32 %v2105, 2.0
  %v2234 = vmul.f32 %v2106, 2.0
  %v2235 = vmul.f32 %v2107, 2.0
  %v2236 = vmul.f32 %v2108, 2.0
  %v2237 = vmul.f32 %v2109, 2.0
  %v2238 = vmul.f32 %v2110, 2.0
  %v2239 = vmul.f32 %v2111, 2.0
  %v2240 = vmul.f32 %v2112, 2.0
  %v2241 = vmul.f32 %v2113, 2.0
  %v2242 = vmul.f32 %v2114, 2.0
  %v2243 = vmul.f32 %v2115, 2.0
  %v2244 = vmul.f32 %v2116, 2.0
  %v2245 = vmul.f32 %v2117, 2.0
  %v2246 = vmul.f32 %v2118, 2.0
  %v2247 = vmul.f32 %v2119, 2.0
  %v2248 = vmul.f32 %v2120, 2.0
  %v2249 = vmul.f32 %v2121, 2.0
  %v2250 = vadd.f32 %v2218, 0.0009
  %v2251 = vadd.f32 %v2219, 0.0009
  %v2252 = vadd.f32 %v2220, 0.0009
  %v2253 = vadd.f32 %v2221, 0.0009
  %v2254 = vadd.f32 %v2222, 0.0009
  %v2255 = vadd.f32 %v2223, 0.0009
  %v2256 = vadd.f32 %v2224, 0.0009
  %v2257 = vadd.f32 %v2225, 0.0009
  %v2258 = vadd.f32 %v2226, 0.0009
  %v2259 = vadd.f32 %v2227, 0.0009
  %v2260 = vadd.f32 %v2228, 0.0009
  %v2261 = vadd.f32 %v2229, 0.0009
  %v2262 = vadd.f32 %v2230, 0.0009
  %v2263 = vadd.f32 %v2231, 0.0009
  %v2264 = vadd.f32 %v2232, 0.0009
  %v2265 = vadd.f32 %v2233, 0.0009
  %v2266 = vadd.f32 %v2234, 0.0009
  %v2267 = vadd.f32 %v2235, 0.0009
  %v2268 = vadd.f32 %v2236, 0.0009
  %v2269 = vadd.f32 %v2237, 0.0009
  %v2270 = vadd.f32 %v2238, 0.0009
  %v2271 = vadd.f32 %v2239, 0.0009
  %v2272 = vadd.f32 %v2240, 0.0009
  %v2273 = vadd.f32 %v2241, 0.0009
  %v2274 = vadd.f32 %v2242, 0.0009
  %v2275 = vadd.f32 %v2243, 0.0009
  %v2276 = vadd.f32 %v2244, 0.0009
  %v2277 = vadd.f32 %v2245, 0.0009
  %v2278 = vadd.f32 %v2246, 0.0009
  %v2279 = vadd.f32 %v2247, 0.0009
  %v2280 = vadd.f32 %v2248, 0.0009
  %v2281 = vadd.f32 %v2249, 0.0009
  %v2282 = vmul.f32 %v2186, %v2250
  %v2283 = vmul.f32 %v2187, %v2251
  %v2284 = vmul.f32 %v2188, %v2252
  %v2285 = vmul.f32 %v2189, %v2253
  %v2286 = vmul.f32 %v2190, %v2254
  %v2287 = vmul.f32 %v2191, %v2255
  %v2288 = vmul.f32 %v2192, %v2256
  %v2289 = vmul.f32 %v2193, %v2257
  %v2290 = vmul.f32 %v2194, %v2258
  %v2291 = vmul.f32 %v2195, %v2259
  %v2292 = vmul.f32 %v2196, %v2260
  %v2293 = vmul.f32 %v2197, %v2261
  %v2294 = vmul.f32 %v2198, %v2262
  %v2295 = vmul.f32 %v2199, %v2263
  %v2296 = vmul.f32 %v2200, %v2264
  %v2297 = vmul.f32 %v2201, %v2265
  %v2298 = vmul.f32 %v2202, %v2266
  %v2299 = vmul.f32 %v2203, %v2267
  %v2300 = vmul.f32 %v2204, %v2268
  %v2301 = vmul.f32 %v2205, %v2269
  %v2302 = vmul.f32 %v2206, %v2270
  %v2303 = vmul.f32 %v2207, %v2271
  %v2304 = vmul.f32 %v2208, %v2272
  %v2305 = vmul.f32 %v2209, %v2273
  %v2306 = vmul.f32 %v2210, %v2274
  %v2307 = vmul.f32 %v2211, %v2275
  %v2308 = vmul.f32 %v2212, %v2276
  %v2309 = vmul.f32 %v2213, %v2277
  %v2310 = vmul.f32 %v2214, %v2278
  %v2311 = vmul.f32 %v2215, %v2279
  %v2312 = vmul.f32 %v2216, %v2280
  %v2313 = vmul.f32 %v2217, %v2281
  %v2314 = vadd.f32 %v1166, %v1612
  %v2315 = vadd.f32 %v1167, %v1613
  %v2316 = vadd.f32 %v1168, %v1614
  %v2317 = vadd.f32 %v1169, %v1615
  %v2318 = vadd.f32 %v1170, %v1616
  %v2319 = vadd.f32 %v1171, %v1617
  %v2320 = vadd.f32 %v1172, %v1618
  %v2321 = vadd.f32 %v1173, %v1619
  %v2322 = vadd.f32 %v1174, %v1620
  %v2323 = vadd.f32 %v1175, %v1621
  %v2324 = vadd.f32 %v1176, %v1622
  %v2325 = vadd.f32 %v1177, %v1623
  %v2326 = vadd.f32 %v1178, %v1624
  %v2327 = vadd.f32 %v1179, %v1625
  %v2328 = vadd.f32 %v1180, %v1626
  %v2329 = vadd.f32 %v1181, %v1627
  %v2330 = vadd.f32 %v1182, %v1628
  %v2331 = vadd.f32 %v1183, %v1629
  %v2332 = vadd.f32 %v1184, %v1630
  %v2333 = vadd.f32 %v1185, %v1631
  %v2334 = vadd.f32 %v1186, %v1632
  %v2335 = vadd.f32 %v1187, %v1633
  %v2336 = vadd.f32 %v1188, %v1634
  %v2337 = vadd.f32 %v1189, %v1635
  %v2338 = vadd.f32 %v1190, %v1636
  %v2339 = vadd.f32 %v1191, %v1637
  %v2340 = vadd.f32 %v1192, %v1638
  %v2341 = vadd.f32 %v1193, %v1639
  %v2342 = vadd.f32 %v1194, %v1640
  %v2343 = vadd.f32 %v1195, %v1641
  %v2344 = vadd.f32 %v1196, %v1642
  %v2345 = vadd.f32 %v1197, %v1643
  %v2346 = vadd.f32 %v2314, 0.0001
  %v2347 = vadd.f32 %v2315, 0.0001
  %v2348 = vadd.f32 %v2316, 0.0001
  %v2349 = vadd.f32 %v2317, 0.0001
  %v2350 = vadd.f32 %v2318, 0.0001
  %v2351 = vadd.f32 %v2319, 0.0001
  %v2352 = vadd.f32 %v2320, 0.0001
  %v2353 = vadd.f32 %v2321, 0.0001
  %v2354 = vadd.f32 %v2322, 0.0001
  %v2355 = vadd.f32 %v2323, 0.0001
  %v2356 = vadd.f32 %v2324, 0.0001
  %v2357 = vadd.f32 %v2325, 0.0001
  %v2358 = vadd.f32 %v2326, 0.0001
  %v2359 = vadd.f32 %v2327, 0.0001
  %v2360 = vadd.f32 %v2328, 0.0001
  %v2361 = vadd.f32 %v2329, 0.0001
  %v2362 = vadd.f32 %v2330, 0.0001
  %v2363 = vadd.f32 %v2331, 0.0001
  %v2364 = vadd.f32 %v2332, 0.0001
  %v2365 = vadd.f32 %v2333, 0.0001
  %v2366 = vadd.f32 %v2334, 0.0001
  %v2367 = vadd.f32 %v2335, 0.0001
  %v2368 = vadd.f32 %v2336, 0.0001
  %v2369 = vadd.f32 %v2337, 0.0001
  %v2370 = vadd.f32 %v2338, 0.0001
  %v2371 = vadd.f32 %v2339, 0.0001
  %v2372 = vadd.f32 %v2340, 0.0001
  %v2373 = vadd.f32 %v2341, 0.0001
  %v2374 = vadd.f32 %v2342, 0.0001
  %v2375 = vadd.f32 %v2343, 0.0001
  %v2376 = vadd.f32 %v2344, 0.0001
  %v2377 = vadd.f32 %v2345, 0.0001
  %v2378 = vadd.f32 %v1198, %v1644
  %v2379 = vadd.f32 %v1199, %v1645
  %v2380 = vadd.f32 %v1200, %v1646
  %v2381 = vadd.f32 %v1201, %v1647
  %v2382 = vadd.f32 %v1202, %v1648
  %v2383 = vadd.f32 %v1203, %v1649
  %v2384 = vadd.f32 %v1204, %v1650
  %v2385 = vadd.f32 %v1205, %v1651
  %v2386 = vadd.f32 %v1206, %v1652
  %v2387 = vadd.f32 %v1207, %v1653
  %v2388 = vadd.f32 %v1208, %v1654
  %v2389 = vadd.f32 %v1209, %v1655
  %v2390 = vadd.f32 %v1210, %v1656
  %v2391 = vadd.f32 %v1211, %v1657
  %v2392 = vadd.f32 %v1212, %v1658
  %v2393 = vadd.f32 %v1213, %v1659
  %v2394 = vadd.f32 %v1214, %v1660
  %v2395 = vadd.f32 %v1215, %v1661
  %v2396 = vadd.f32 %v1216, %v1662
  %v2397 = vadd.f32 %v1217, %v1663
  %v2398 = vadd.f32 %v1218, %v1664
  %v2399 = vadd.f32 %v1219, %v1665
  %v2400 = vadd.f32 %v1220, %v1666
  %v2401 = vadd.f32 %v1221, %v1667
  %v2402 = vadd.f32 %v1222, %v1668
  %v2403 = vadd.f32 %v1223, %v1669
  %v2404 = vadd.f32 %v1224, %v1670
  %v2405 = vadd.f32 %v1225, %v1671
  %v2406 = vadd.f32 %v1226, %v1672
  %v2407 = vadd.f32 %v1227, %v1673
  %v2408 = vadd.f32 %v1228, %v1674
  %v2409 = vadd.f32 %v1229, %v1675
  %v2410 = vadd.f32 %v2378, 0.0009
  %v2411 = vadd.f32 %v2379, 0.0009
  %v2412 = vadd.f32 %v2380, 0.0009
  %v2413 = vadd.f32 %v2381, 0.0009
  %v2414 = vadd.f32 %v2382, 0.0009
  %v2415 = vadd.f32 %v2383, 0.0009
  %v2416 = vadd.f32 %v2384, 0.0009
  %v2417 = vadd.f32 %v2385, 0.0009
  %v2418 = vadd.f32 %v2386, 0.0009
  %v2419 = vadd.f32 %v2387, 0.0009
  %v2420 = vadd.f32 %v2388, 0.0009
  %v2421 = vadd.f32 %v2389, 0.0009
  %v2422 = vadd.f32 %v2390, 0.0009
  %v2423 = vadd.f32 %v2391, 0.0009
  %v2424 = vadd.f32 %v2392, 0.0009
  %v2425 = vadd.f32 %v2393, 0.0009
  %v2426 = vadd.f32 %v2394, 0.0009
  %v2427 = vadd.f32 %v2395, 0.0009
  %v2428 = vadd.f32 %v2396, 0.0009
  %v2429 = vadd.f32 %v2397, 0.0009
  %v2430 = vadd.f32 %v2398, 0.0009
  %v2431 = vadd.f32 %v2399, 0.0009
  %v2432 = vadd.f32 %v2400, 0.0009
  %v2433 = vadd.f32 %v2401, 0.0009
  %v2434 = vadd.f32 %v2402, 0.0009
  %v2435 = vadd.f32 %v2403, 0.0009
  %v2436 = vadd.f32 %v2404, 0.0009
  %v2437 = vadd.f32 %v2405, 0.0009
  %v2438 = vadd.f32 %v2406, 0.0009
  %v2439 = vadd.f32 %v2407, 0.0009
  %v2440 = vadd.f32 %v2408, 0.0009
  %v2441 = vadd.f32 %v2409, 0.0009
  %v2442 = vmul.f32 %v2346, %v2410
  %v2443 = vmul.f32 %v2347, %v2411
  %v2444 = vmul.f32 %v2348, %v2412
  %v2445 = vmul.f32 %v2349, %v2413
  %v2446 = vmul.f32 %v2350, %v2414
  %v2447 = vmul.f32 %v2351, %v2415
  %v2448 = vmul.f32 %v2352, %v2416
  %v2449 = vmul.f32 %v2353, %v2417
  %v2450 = vmul.f32 %v2354, %v2418
  %v2451 = vmul.f32 %v2355, %v2419
  %v2452 = vmul.f32 %v2356, %v2420
  %v2453 = vmul.f32 %v2357, %v2421
  %v2454 = vmul.f32 %v2358, %v2422
  %v2455 = vmul.f32 %v2359, %v2423
  %v2456 = vmul.f32 %v2360, %v2424
  %v2457 = vmul.f32 %v2361, %v2425
  %v2458 = vmul.f32 %v2362, %v2426
  %v2459 = vmul.f32 %v2363, %v2427
  %v2460 = vmul.f32 %v2364, %v2428
  %v2461 = vmul.f32 %v2365, %v2429
  %v2462 = vmul.f32 %v2366, %v2430
  %v2463 = vmul.f32 %v2367, %v2431
  %v2464 = vmul.f32 %v2368, %v2432
  %v2465 = vmul.f32 %v2369, %v2433
  %v2466 = vmul.f32 %v2370, %v2434
  %v2467 = vmul.f32 %v2371, %v2435
  %v2468 = vmul.f32 %v2372, %v2436
  %v2469 = vmul.f32 %v2373, %v2437
  %v2470 = vmul.f32 %v2374, %v2438
  %v2471 = vmul.f32 %v2375, %v2439
  %v2472 = vmul.f32 %v2376, %v2440
  %v2473 = vmul.f32 %v2377, %v2441
  %v2474 = vrcp.pop %v2442
  %v2475 = vrcp.pop %v2443
  %v2476 = vrcp.pop %v2444
  %v2477 = vrcp.pop %v2445
  %v2478 = vrcp.pop %v2446
  %v2479 = vrcp.pop %v2447
  %v2480 = vrcp.pop %v2448
  %v2481 = vrcp.pop %v2449
  %v2482 = vrcp.pop %v2450
  %v2483 = vrcp.pop %v2451
  %v2484 = vrcp.pop %v2452
  %v2485 = vrcp.pop %v2453
  %v2486 = vrcp.pop %v2454
  %v2487 = vrcp.pop %v2455
  %v2488 = vrcp.pop %v2456
  %v2489 = vrcp.pop %v2457
  %v2490 = vrcp.pop %v2458
  %v2491 = vrcp.pop %v2459
  %v2492 = vrcp.pop %v2460
  %v2493 = vrcp.pop %v2461
  %v2494 = vrcp.pop %v2462
  %v2495 = vrcp.pop %v2463
  %v2496 = vrcp.pop %v2464
  %v2497 = vrcp.pop %v2465
  %v2498 = vrcp.pop %v2466
  %v2499 = vrcp.pop %v2467
  %v2500 = vrcp.pop %v2468
  %v2501 = vrcp.pop %v2469
  %v2502 = vrcp.pop %v2470
  %v2503 = vrcp.pop %v2471
  %v2504 = vrcp.pop %v2472
  %v2505 = vrcp.pop %v2473
  %v2506 = vmul.f32 %v2282, %v2474
  %v2507 = vmul.f32 %v2283, %v2475
  %v2508 = vmul.f32 %v2284, %v2476
  %v2509 = vmul.f32 %v2285, %v2477
  %v2510 = vmul.f32 %v2286, %v2478
  %v2511 = vmul.f32 %v2287, %v2479
  %v2512 = vmul.f32 %v2288, %v2480
  %v2513 = vmul.f32 %v2289, %v2481
  %v2514 = vmul.f32 %v2290, %v2482
  %v2515 = vmul.f32 %v2291, %v2483
  %v2516 = vmul.f32 %v2292, %v2484
  %v2517 = vmul.f32 %v2293, %v2485
  %v2518 = vmul.f32 %v2294, %v2486
  %v2519 = vmul.f32 %v2295, %v2487
  %v2520 = vmul.f32 %v2296, %v2488
  %v2521 = vmul.f32 %v2297, %v2489
  %v2522 = vmul.f32 %v2298, %v2490
  %v2523 = vmul.f32 %v2299, %v2491
  %v2524 = vmul.f32 %v2300, %v2492
  %v2525 = vmul.f32 %v2301, %v2493
  %v2526 = vmul.f32 %v2302, %v2494
  %v2527 = vmul.f32 %v2303, %v2495
  %v2528 = vmul.f32 %v2304, %v2496
  %v2529 = vmul.f32 %v2305, %v2497
  %v2530 = vmul.f32 %v2306, %v2498
  %v2531 = vmul.f32 %v2307, %v2499
  %v2532 = vmul.f32 %v2308, %v2500
  %v2533 = vmul.f32 %v2309, %v2501
  %v2534 = vmul.f32 %v2310, %v2502
  %v2535 = vmul.f32 %v2311, %v2503
  %v2536 = vmul.f32 %v2312, %v2504
  %v2537 = vmul.f32 %v2313, %v2505
  %v2538 = vsub.f32 1.0, %v2506
  %v2539 = vsub.f32 1.0, %v2507
  %v2540 = vsub.f32 1.0, %v2508
  %v2541 = vsub.f32 1.0, %v2509
  %v2542 = vsub.f32 1.0, %v2510
  %v2543 = vsub.f32 1.0, %v2511
  %v2544 = vsub.f32 1.0, %v2512
  %v2545 = vsub.f32 1.0, %v2513
  %v2546 = vsub.f32 1.0, %v2514
  %v2547 = vsub.f32 1.0, %v2515
  %v2548 = vsub.f32 1.0, %v2516
  %v2549 = vsub.f32 1.0, %v2517
  %v2550 = vsub.f32 1.0, %v2518
  %v2551 = vsub.f32 1.0, %v2519
  %v2552 = vsub.f32 1.0, %v2520
  %v2553 = vsub.f32 1.0, %v2521
  %v2554 = vsub.f32 1.0, %v2522
  %v2555 = vsub.f32 1.0, %v2523
  %v2556 = vsub.f32 1.0, %v2524
  %v2557 = vsub.f32 1.0, %v2525
  %v2558 = vsub.f32 1.0, %v2526
  %v2559 = vsub.f32 1.0, %v2527
  %v2560 = vsub.f32 1.0, %v2528
  %v2561 = vsub.f32 1.0, %v2529
  %v2562 = vsub.f32 1.0, %v2530
  %v2563 = vsub.f32 1.0, %v2531
  %v2564 = vsub.f32 1.0, %v2532
  %v2565 = vsub.f32 1.0, %v2533
  %v2566 = vsub.f32 1.0, %v2534
  %v2567 = vsub.f32 1.0, %v2535
  %v2568 = vsub.f32 1.0, %v2536
  %v2569 = vsub.f32 1.0, %v2537
  %v2570 = vmul.f32 %v2538, 0.5
  %v2571 = vmul.f32 %v2539, 0.5
  %v2572 = vmul.f32 %v2540, 0.5
  %v2573 = vmul.f32 %v2541, 0.5
  %v2574 = vmul.f32 %v2542, 0.5
  %v2575 = vmul.f32 %v2543, 0.5
  %v2576 = vmul.f32 %v2544, 0.5
  %v2577 = vmul.f32 %v2545, 0.5
  %v2578 = vmul.f32 %v2546, 0.5
  %v2579 = vmul.f32 %v2547, 0.5
  %v2580 = vmul.f32 %v2548, 0.5
  %v2581 = vmul.f32 %v2549, 0.5
  %v2582 = vmul.f32 %v2550, 0.5
  %v2583 = vmul.f32 %v2551, 0.5
  %v2584 = vmul.f32 %v2552, 0.5
  %v2585 = vmul.f32 %v2553, 0.5
  %v2586 = vmul.f32 %v2554, 0.5
  %v2587 = vmul.f32 %v2555, 0.5
  %v2588 = vmul.f32 %v2556, 0.5
  %v2589 = vmul.f32 %v2557, 0.5
  %v2590 = vmul.f32 %v2558, 0.5
  %v2591 = vmul.f32 %v2559, 0.5
  %v2592 = vmul.f32 %v2560, 0.5
  %v2593 = vmul.f32 %v2561, 0.5
  %v2594 = vmul.f32 %v2562, 0.5
  %v2595 = vmul.f32 %v2563, 0.5
  %v2596 = vmul.f32 %v2564, 0.5
  %v2597 = vmul.f32 %v2565, 0.5
  %v2598 = vmul.f32 %v2566, 0.5
  %v2599 = vmul.f32 %v2567, 0.5
  %v2600 = vmul.f32 %v2568, 0.5
  %v2601 = vmul.f32 %v2569, 0.5
  %v2602 = vmax.f32 %v2570, 0.0
  %v2603 = vmax.f32 %v2571, 0.0
  %v2604 = vmax.f32 %v2572, 0.0
  %v2605 = vmax.f32 %v2573, 0.0
  %v2606 = vmax.f32 %v2574, 0.0
  %v2607 = vmax.f32 %v2575, 0.0
  %v2608 = vmax.f32 %v2576, 0.0
  %v2609 = vmax.f32 %v2577, 0.0
  %v2610 = vmax.f32 %v2578, 0.0
  %v2611 = vmax.f32 %v2579, 0.0
  %v2612 = vmax.f32 %v2580, 0.0
  %v2613 = vmax.f32 %v2581, 0.0
  %v2614 = vmax.f32 %v2582, 0.0
  %v2615 = vmax.f32 %v2583, 0.0
  %v2616 = vmax.f32 %v2584, 0.0
  %v2617 = vmax.f32 %v2585, 0.0
  %v2618 = vmax.f32 %v2586, 0.0
  %v2619 = vmax.f32 %v2587, 0.0
  %v2620 = vmax.f32 %v2588, 0.0
  %v2621 = vmax.f32 %v2589, 0.0
  %v2622 = vmax.f32 %v2590, 0.0
  %v2623 = vmax.f32 %v2591, 0.0
  %v2624 = vmax.f32 %v2592, 0.0
  %v2625 = vmax.f32 %v2593, 0.0
  %v2626 = vmax.f32 %v2594, 0.0
  %v2627 = vmax.f32 %v2595, 0.0
  %v2628 = vmax.f32 %v2596, 0.0
  %v2629 = vmax.f32 %v2597, 0.0
  %v2630 = vmax.f32 %v2598, 0.0
  %v2631 = vmax.f32 %v2599, 0.0
  %v2632 = vmax.f32 %v2600, 0.0
  %v2633 = vmax.f32 %v2601, 0.0
  %v2634 = vmin.f32 %v2602, 1.0
  %v2635 = vmin.f32 %v2603, 1.0
  %v2636 = vmin.f32 %v2604, 1.0
  %v2637 = vmin.f32 %v2605, 1.0
  %v2638 = vmin.f32 %v2606, 1.0
  %v2639 = vmin.f32 %v2607, 1.0
  %v2640 = vmin.f32 %v2608, 1.0
  %v2641 = vmin.f32 %v2609, 1.0
  %v2642 = vmin.f32 %v2610, 1.0
  %v2643 = vmin.f32 %v2611, 1.0
  %v2644 = vmin.f32 %v2612, 1.0
  %v2645 = vmin.f32 %v2613, 1.0
  %v2646 = vmin.f32 %v2614, 1.0
  %v2647 = vmin.f32 %v2615, 1.0
  %v2648 = vmin.f32 %v2616, 1.0
  %v2649 = vmin.f32 %v2617, 1.0
  %v2650 = vmin.f32 %v2618, 1.0
  %v2651 = vmin.f32 %v2619, 1.0
  %v2652 = vmin.f32 %v2620, 1.0
  %v2653 = vmin.f32 %v2621, 1.0
  %v2654 = vmin.f32 %v2622, 1.0
  %v2655 = vmin.f32 %v2623, 1.0
  %v2656 = vmin.f32 %v2624, 1.0
  %v2657 = vmin.f32 %v2625, 1.0
  %v2658 = vmin.f32 %v2626, 1.0
  %v2659 = vmin.f32 %v2627, 1.0
  %v2660 = vmin.f32 %v2628, 1.0
  %v2661 = vmin.f32 %v2629, 1.0
  %v2662 = vmin.f32 %v2630, 1.0
  %v2663 = vmin.f32 %v2631, 1.0
  %v2664 = vmin.f32 %v2632, 1.0
  %v2665 = vmin.f32 %v2633, 1.0
  %vm2666 = vcmask 64512
  %2667 = vst.msk [vmem:[%s2] sm:$0xff] %vm2666, %v2634
  %2668 = vst.msk [vmem:[%s2 + $0x8] sm:$0xff] %vm2666, %v2635
  %2669 = vst.msk [vmem:[%s2 + $0x10] sm:$0xff] %vm2666, %v2636
  %2670 = vst.msk [vmem:[%s2 + $0x18] sm:$0xff] %vm2666, %v2637
  %2671 = vst.msk [vmem:[%s2 + $0x20] sm:$0xff] %vm2666, %v2638
  %2672 = vst.msk [vmem:[%s2 + $0x28] sm:$0xff] %vm2666, %v2639
  %2673 = vst.msk [vmem:[%s2 + $0x30] sm:$0xff] %vm2666, %v2640
  %2674 = vst.msk [vmem:[%s2 + $0x38] sm:$0xff] %vm2666, %v2641
  %2675 = vst.msk [vmem:[%s2 + $0x40] sm:$0xff] %vm2666, %v2642
  %2676 = vst.msk [vmem:[%s2 + $0x48] sm:$0xff] %vm2666, %v2643
  %2677 = vst.msk [vmem:[%s2 + $0x50] sm:$0xff] %vm2666, %v2644
  %2678 = vst.msk [vmem:[%s2 + $0x58] sm:$0xff] %vm2666, %v2645
  %2679 = vst.msk [vmem:[%s2 + $0x60] sm:$0xff] %vm2666, %v2646
  %2680 = vst.msk [vmem:[%s2 + $0x68] sm:$0xff] %vm2666, %v2647
  %2681 = vst.msk [vmem:[%s2 + $0x70] sm:$0xff] %vm2666, %v2648
  %2682 = vst.msk [vmem:[%s2 + $0x78] sm:$0xff] %vm2666, %v2649
  %2683 = vst.msk [vmem:[%s2 + $0x80] sm:$0xff] %vm2666, %v2650
  %2684 = vst.msk [vmem:[%s2 + $0x88] sm:$0xff] %vm2666, %v2651
  %2685 = vst.msk [vmem:[%s2 + $0x90] sm:$0xff] %vm2666, %v2652
  %2686 = vst.msk [vmem:[%s2 + $0x98] sm:$0xff] %vm2666, %v2653
  %2687 = vst.msk [vmem:[%s2 + $0xa0] sm:$0xff] %vm2666, %v2654
  %2688 = vst.msk [vmem:[%s2 + $0xa8] sm:$0xff] %vm2666, %v2655
  %2689 = vst.msk [vmem:[%s2 + $0xb0] sm:$0xff] %vm2666, %v2656
  %2690 = vst.msk [vmem:[%s2 + $0xb8] sm:$0xff] %vm2666, %v2657
  %2691 = vst.msk [vmem:[%s2 + $0xc0] sm:$0xff] %vm2666, %v2658
  %2692 = vst.msk [vmem:[%s2 + $0xc8] sm:$0xff] %vm2666, %v2659
  %2693 = vst.msk [vmem:[%s2 + $0xd0] sm:$0xff] %vm2666, %v2660
  %2694 = vst.msk [vmem:[%s2 + $0xd8] sm:$0xff] %vm2666, %v2661
  %2695 = vst.msk [vmem:[%s2 + $0xe0] sm:$0xff] %vm2666, %v2662
  %2696 = vst.msk [vmem:[%s2 + $0xe8] sm:$0xff] %vm2666, %v2663
  %2697 = vst.msk [vmem:[%s2 + $0xf0] sm:$0xff] %vm2666, %v2664
  %2698 = vst.msk [vmem:[%s2 + $0xf8] sm:$0xff] %vm2666, %v2665
  // Predicated region
  $region10: #{tpu_custom_call.1} parent=0 // pred_check
    _
  $region11: #{tpu_custom_call.1} parent=0 // pred_check_branch
    %2700 = sbr.rel (0) target = $region13
  $region12: #{tpu_custom_call.1} parent=0 // pred_region
    _
  $region13: #{tpu_custom_call.1} parent=0 // pred_fallthru
    _
  // Predicated region
  $region14: #{tpu_custom_call.1} parent=0 // pred_check
    _
  $region15: #{tpu_custom_call.1} parent=0 // pred_check_branch
    %2702 = sbr.rel (0) target = $region17
  $region16: #{tpu_custom_call.1} parent=0 // pred_region
    _
  $region17: #{tpu_custom_call.1} parent=0 // pred_fallthru
    _

</llo_original>
